<compile_context>
chip_gen: v7x
topology: tpu7x:2x2x1
jax: 0.10.0
libtpu: 0.0.40
codegen_flags: <defaults>
</compile_context>

<pallas_src>
import math
import jax
import jax.numpy as jnp
from jax import lax
from jax.experimental import pallas as pl
from jax.experimental.pallas import tpu as pltpu

_VMEM = pl.BlockSpec(memory_space=pltpu.MemorySpace.VMEM)


# ----------------------------------------------------------------------------
# Pallas kernels
# ----------------------------------------------------------------------------
def conv_stack_kernel(x_ref, w1_ref, b1_ref, w2_ref, b2_ref, o_ref,
                      p0_scr, p_scr):
    # x_ref: (T, B, idim) time-major.  w1: (3*idim, C), w2: (3*C, C),
    # biases: (1, C).  o_ref: (T, B, C).
    # p0_scr/p_scr: zero-padded activations (T+2, B, idim)/(T+2, B, C); halo
    # rows are zeroed once and only the interior is rewritten per layer.
    T, B, idim = x_ref.shape
    C = w2_ref.shape[1]

    def conv(pad_ref, w_ref, b_ref, cin):
        p = pad_ref[...]
        # im2col slab: the 3 taps are cheap leading-axis (time) slices, fused
        # into ONE MXU matmul with K = 3*cin.
        slab = jnp.concatenate([p[0:T], p[1:T + 1], p[2:T + 2]],
                               axis=-1).reshape(T * B, 3 * cin)
        y = jnp.dot(slab, w_ref[...], preferred_element_type=jnp.float32)
        return jnp.maximum(y + b_ref[...], 0.0)               # (T*B, C)

    # layer 0: Conv1d(idim, C) + ReLU
    p0_scr[...] = jnp.zeros_like(p0_scr)
    p0_scr[1:T + 1] = x_ref[...]
    y = conv(p0_scr, w1_ref, b1_ref, idim)

    # layers 1..4: shared-weight Conv1d(C, C) + ReLU; activation stays in VMEM
    p_scr[...] = jnp.zeros_like(p_scr)
    for _ in range(4):
        p_scr[1:T + 1] = y.reshape(T, B, C)
        y = conv(p_scr, w2_ref, b2_ref, C)

    o_ref[...] = y.reshape(T, B, C)


def _bidir_lstm_steps(x_ref, wih_f_ref, whh_f_ref, b_f_ref,
                      wih_b_ref, whh_b_ref, b_b_ref,
                      gxf_scr, gxb_scr, hf_scr, cf_scr, hb_scr, cb_scr, emit):
    # x_ref: (T, B, Cin) time-major.  Gate order follows PyTorch: i, f, g, o.
    T, B, Cin = x_ref.shape
    H = whh_f_ref.shape[0]

    # Hoisted input projection: one (T*B, Cin) x (Cin, 4H) matmul per
    # direction instead of T tiny matmuls inside the recurrence.
    x2d = x_ref[...].reshape(T * B, Cin)
    gxf_scr[...] = (jnp.dot(x2d, wih_f_ref[...],
                            preferred_element_type=jnp.float32)
                    + b_f_ref[...]).reshape(T, B, 4 * H)
    gxb_scr[...] = (jnp.dot(x2d, wih_b_ref[...],
                            preferred_element_type=jnp.float32)
                    + b_b_ref[...]).reshape(T, B, 4 * H)

    hf_scr[...] = jnp.zeros_like(hf_scr)
    cf_scr[...] = jnp.zeros_like(cf_scr)
    hb_scr[...] = jnp.zeros_like(hb_scr)
    cb_scr[...] = jnp.zeros_like(cb_scr)

    def cell(gx, h, c, whh_ref):
        gates = gx + jnp.dot(h, whh_ref[...],
                             preferred_element_type=jnp.float32)   # (B, 4H)
        i = jax.nn.sigmoid(gates[:, 0 * H:1 * H])
        f = jax.nn.sigmoid(gates[:, 1 * H:2 * H])
        g = jnp.tanh(gates[:, 2 * H:3 * H])
        o = jax.nn.sigmoid(gates[:, 3 * H:4 * H])
        c_new = f * c + i * g
        h_new = o * jnp.tanh(c_new)
        return h_new, c_new

    def step(t, carry):
        tb = T - 1 - t
        h_f, c_f = cell(gxf_scr[t], hf_scr[...], cf_scr[...], whh_f_ref)
        h_b, c_b = cell(gxb_scr[tb], hb_scr[...], cb_scr[...], whh_b_ref)
        hf_scr[...] = h_f
        cf_scr[...] = c_f
        hb_scr[...] = h_b
        cb_scr[...] = c_b
        emit(t, tb, h_f, h_b)
        return carry

    lax.fori_loop(0, T, step, 0)


def blstm_mid_kernel(x_ref, wih_f, whh_f, b_f, wih_b, whh_b, b_b, o_ref,
                     gxf, gxb, hf, cf, hb, cb, of_scr, ob_scr):
    # Fused fwd+bwd LSTM layer.  o_ref: (T, B, 2H) time-major.
    def emit(t, tb, h_f, h_b):
        of_scr[t] = h_f
        ob_scr[tb] = h_b

    _bidir_lstm_steps(x_ref, wih_f, whh_f, b_f, wih_b, whh_b, b_b,
                      gxf, gxb, hf, cf, hb, cb, emit)
    o_ref[...] = jnp.concatenate([of_scr[...], ob_scr[...]], axis=-1)


def blstm_head_kernel(x_ref, wih_f, whh_f, b_f, wih_b, whh_b, b_b,
                      w1_ref, b1_ref, w2_ref, b2_ref, o_ref,
                      gxf, gxb, hf, cf, hb, cb, sf_scr, sb_scr):
    # Last BLSTM layer with the head fused in: time-mean -> Linear+ReLU ->
    # Linear.  The full (T, B, 2H) sequence of this layer never leaves VMEM.
    T = x_ref.shape[0]
    sf_scr[...] = jnp.zeros_like(sf_scr)
    sb_scr[...] = jnp.zeros_like(sb_scr)

    def emit(t, tb, h_f, h_b):
        sf_scr[...] = sf_scr[...] + h_f
        sb_scr[...] = sb_scr[...] + h_b

    _bidir_lstm_steps(x_ref, wih_f, whh_f, b_f, wih_b, whh_b, b_b,
                      gxf, gxb, hf, cf, hb, cb, emit)

    m = jnp.concatenate([sf_scr[...], sb_scr[...]], axis=-1) * (1.0 / T)
    hid = jnp.maximum(
        jnp.dot(m, w1_ref[...], preferred_element_type=jnp.float32)
        + b1_ref[...], 0.0)
    # TODO(synk): nn.Dropout (lin_1 and inter-layer LSTM dropout) is identity
    # at inference and therefore omitted.
    o_ref[...] = (jnp.dot(hid, w2_ref[...], preferred_element_type=jnp.float32)
                  + b2_ref[...]).astype(o_ref.dtype)


# ----------------------------------------------------------------------------
# Pallas wrappers (full-array blocks in VMEM; shapes are tiny)
# ----------------------------------------------------------------------------
def conv_stack(x_tm, w1, b1, w2, b2):
    T, B, idim = x_tm.shape
    C = w2.shape[1]
    return pl.pallas_call(
        conv_stack_kernel,
        out_shape=jax.ShapeDtypeStruct((T, B, C), jnp.float32),
        in_specs=[_VMEM] * 5,
        out_specs=_VMEM,
        scratch_shapes=[pltpu.VMEM((T + 2, B, idim), jnp.float32),
                        pltpu.VMEM((T + 2, B, C), jnp.float32)],
    )(x_tm, w1, b1, w2, b2)


def _lstm_scratches(T, B, H):
    return [pltpu.VMEM((T, B, 4 * H), jnp.float32),   # gx fwd
            pltpu.VMEM((T, B, 4 * H), jnp.float32),   # gx bwd
            pltpu.VMEM((B, H), jnp.float32),          # h fwd
            pltpu.VMEM((B, H), jnp.float32),          # c fwd
            pltpu.VMEM((B, H), jnp.float32),          # h bwd
            pltpu.VMEM((B, H), jnp.float32)]          # c bwd


def blstm_mid(x_tm, p_fwd, p_bwd):
    T, B, _ = x_tm.shape
    H = p_fwd[1].shape[0]
    return pl.pallas_call(
        blstm_mid_kernel,
        out_shape=jax.ShapeDtypeStruct((T, B, 2 * H), jnp.float32),
        in_specs=[_VMEM] * 7,
        out_specs=_VMEM,
        scratch_shapes=_lstm_scratches(T, B, H)
        + [pltpu.VMEM((T, B, H), jnp.float32),        # fwd outputs
           pltpu.VMEM((T, B, H), jnp.float32)],       # bwd outputs
    )(x_tm, *p_fwd, *p_bwd)


def blstm_head(x_tm, p_fwd, p_bwd, w1, b1, w2, b2):
    T, B, _ = x_tm.shape
    H = p_fwd[1].shape[0]
    ncls = w2.shape[1]
    return pl.pallas_call(
        blstm_head_kernel,
        out_shape=jax.ShapeDtypeStruct((B, ncls), jnp.float32),
        in_specs=[_VMEM] * 11,
        out_specs=_VMEM,
        scratch_shapes=_lstm_scratches(T, B, H)
        + [pltpu.VMEM((B, H), jnp.float32),           # sum fwd
           pltpu.VMEM((B, H), jnp.float32)],          # sum bwd
    )(x_tm, *p_fwd, *p_bwd, w1, b1, w2, b2)


def cnn_blstm_forward(x, params, nlay):
    # x: (B, T, idim) batch-major (PyTorch batch_first).  Single relayout to
    # time-major here; everything downstream stays (T, B, C).
    x_tm = jnp.transpose(x, (1, 0, 2))
    h = conv_stack(x_tm, params['conv_w'], params['conv_b'],
                   params['conv2_w'], params['conv2_b'])
    for l in range(nlay - 1):
        h = blstm_mid(h, params['lstm'][l]['fwd'], params['lstm'][l]['bwd'])
    last = params['lstm'][nlay - 1]
    return blstm_head(h, last['fwd'], last['bwd'],
                      params['w1'], params['b1'], params['w2'], params['b2'])


# ----------------------------------------------------------------------------
# Pure-JAX reference (same math, no Pallas) for a sanity check
# ----------------------------------------------------------------------------
def _conv_ref(x, w_flat, b):
    B, T, Cin = x.shape
    Cout = w_flat.shape[1]
    w = w_flat.reshape(3, Cin, Cout)
    xpad = jnp.pad(x, ((0, 0), (1, 1), (0, 0)))
    y = sum(jnp.einsum('btc,cd->btd', xpad[:, k:k + T, :], w[k])
            for k in range(3))
    return jnp.maximum(y + b[0], 0.0)


def _lstm_ref_dir(x_tm, wih, whh, b):
    T, B, _ = x_tm.shape
    H = whh.shape[0]

    def step(carry, x_t):
        hh, cc = carry
        gates = x_t @ wih + hh @ whh + b[0]
        i = jax.nn.sigmoid(gates[:, :H])
        f = jax.nn.sigmoid(gates[:, H:2 * H])
        g = jnp.tanh(gates[:, 2 * H:3 * H])
        o = jax.nn.sigmoid(gates[:, 3 * H:])
        cc = f * cc + i * g
        hh = o * jnp.tanh(cc)
        return (hh, cc), hh

    init = (jnp.zeros((B, H), jnp.float32), jnp.zeros((B, H), jnp.float32))
    _, ys = lax.scan(step, init, x_tm)
    return ys


def _forward_ref(x, params, nlay):
    h = _conv_ref(x, params['conv_w'], params['conv_b'])
    for _ in range(4):
        h = _conv_ref(h, params['conv2_w'], params['conv2_b'])
    for l in range(nlay):
        x_tm = jnp.transpose(h, (1, 0, 2))
        f = _lstm_ref_dir(x_tm, *params['lstm'][l]['fwd'])
        bwd = _lstm_ref_dir(x_tm[::-1], *params['lstm'][l]['bwd'])[::-1]
        h = jnp.transpose(jnp.concatenate([f, bwd], axis=-1), (1, 0, 2))
    m = jnp.mean(h, axis=1)
    hid = jnp.maximum(m @ params['w1'] + params['b1'][0], 0.0)
    return hid @ params['w2'] + params['b2'][0]


# ----------------------------------------------------------------------------
# Deterministic parameter init (PyTorch-style uniform bounds)
# ----------------------------------------------------------------------------
def init_params(key, idim, num_classes, nhu, nhu2, nlay):
    nhu3 = 60
    keys = iter(jax.random.split(key, 128))

    def u(shape, fan):
        bound = 1.0 / math.sqrt(fan)
        return jax.random.uniform(next(keys), shape, jnp.float32, -bound, bound)

    params = {
        # conv weights stored tap-major flat: row k*Cin + c  <->  tap k, chan c
        'conv_w': u((3 * idim, nhu3), idim * 3),
        'conv_b': u((1, nhu3), idim * 3),
        'conv2_w': u((3 * nhu3, nhu3), nhu3 * 3),
        'conv2_b': u((1, nhu3), nhu3 * 3),
        'w1': u((2 * nhu, nhu2), 2 * nhu),
        'b1': u((1, nhu2), 2 * nhu),
        'w2': u((nhu2, num_classes), nhu2),
        'b2': u((1, num_classes), nhu2),
        'lstm': [],
    }
    for l in range(nlay):
        cin = nhu3 if l == 0 else 2 * nhu
        layer = {}
        for d in ('fwd', 'bwd'):
            wih = u((cin, 4 * nhu), nhu)
            whh = u((nhu, 4 * nhu), nhu)
            bias = u((1, 4 * nhu), nhu) + u((1, 4 * nhu), nhu)   # b_ih + b_hh
            layer[d] = (wih, whh, bias)
        params['lstm'].append(layer)
    return params


# ----------------------------------------------------------------------------
if __name__ == "__main__":
    B, T, idim = 2, 16, 8
    nhu, nhu2, nlay, num_classes = 32, 16, 2, 5

    key = jax.random.PRNGKey(0)
    kx, kp = jax.random.split(key)
    x = jax.random.normal(kx, (B, T, idim), jnp.float32)
    params = init_params(kp, idim, num_classes, nhu, nhu2, nlay)

    out = jax.block_until_ready(cnn_blstm_forward(x, params, nlay))
    assert out.shape == (B, num_classes)

    ref = jax.block_until_ready(_forward_ref(x, params, nlay))
    max_err = float(jnp.max(jnp.abs(out - ref)))
    assert max_err < 1e-3, f"mismatch vs reference: {max_err}"

    print("KERNEL_OK")
</pallas_src>

<mosaic_0001>
module attributes {stable_mosaic.version = 11 : i64} {
  func.func @conv_stack_kernel(%arg0: memref<16x2x8xf32, #tpu.memory_space<vmem>>, %arg1: memref<24x60xf32, #tpu.memory_space<vmem>>, %arg2: memref<1x60xf32, #tpu.memory_space<vmem>>, %arg3: memref<180x60xf32, #tpu.memory_space<vmem>>, %arg4: memref<1x60xf32, #tpu.memory_space<vmem>>, %arg5: memref<16x2x60xf32, #tpu.memory_space<vmem>>, %arg6: memref<18x2x8xf32, #tpu.memory_space<vmem>>, %arg7: memref<18x2x60xf32, #tpu.memory_space<vmem>>) attributes {dimension_semantics = [], scalar_prefetch = 0 : i64, scratch_operands = 2 : i64, tpu.core_type = #tpu.core_type<tc>} {
    %cst = arith.constant 0.000000e+00 : f32
    %0 = vector.broadcast %cst : f32 to vector<18x2x8xf32>
    %c0 = arith.constant 0 : index
    %c0_0 = arith.constant 0 : index
    %c0_1 = arith.constant 0 : index
    %1 = vector.load %arg6[%c0, %c0_0, %c0_1] : memref<18x2x8xf32, #tpu.memory_space<vmem>>, vector<18x2x8xf32>
    tpu.vector_store %arg6[%c0, %c0_0, %c0_1], %0 {strides = array<i32>} : memref<18x2x8xf32, #tpu.memory_space<vmem>>, vector<18x2x8xf32>,
    %c0_2 = arith.constant 0 : index
    %c0_3 = arith.constant 0 : index
    %c0_4 = arith.constant 0 : index
    %2 = vector.load %arg0[%c0_2, %c0_3, %c0_4] : memref<16x2x8xf32, #tpu.memory_space<vmem>>, vector<16x2x8xf32>
    %c1 = arith.constant 1 : index
    %c0_5 = arith.constant 0 : index
    %c0_6 = arith.constant 0 : index
    %3 = vector.load %arg6[%c1, %c0_5, %c0_6] : memref<18x2x8xf32, #tpu.memory_space<vmem>>, vector<16x2x8xf32>
    tpu.vector_store %arg6[%c1, %c0_5, %c0_6], %2 {strides = array<i32>} : memref<18x2x8xf32, #tpu.memory_space<vmem>>, vector<16x2x8xf32>,
    %c0_7 = arith.constant 0 : index
    %c0_8 = arith.constant 0 : index
    %c0_9 = arith.constant 0 : index
    %4 = vector.load %arg6[%c0_7, %c0_8, %c0_9] : memref<18x2x8xf32, #tpu.memory_space<vmem>>, vector<18x2x8xf32>
    %5 = vector.extract_strided_slice %4 {offsets = [0, 0, 0], sizes = [16, 2, 8], strides = [1, 1, 1]} : vector<18x2x8xf32> to vector<16x2x8xf32>
    %6 = vector.extract_strided_slice %4 {offsets = [1, 0, 0], sizes = [16, 2, 8], strides = [1, 1, 1]} : vector<18x2x8xf32> to vector<16x2x8xf32>
    %7 = vector.extract_strided_slice %4 {offsets = [2, 0, 0], sizes = [16, 2, 8], strides = [1, 1, 1]} : vector<18x2x8xf32> to vector<16x2x8xf32>
    %8 = tpu.concatenate %5, %6, %7 in 2 : vector<16x2x8xf32>, vector<16x2x8xf32>, vector<16x2x8xf32> -> vector<16x2x24xf32>
    %9 = vector.shape_cast %8 : vector<16x2x24xf32> to vector<32x24xf32>
    %c0_10 = arith.constant 0 : index
    %c0_11 = arith.constant 0 : index
    %10 = vector.load %arg1[%c0_10, %c0_11] : memref<24x60xf32, #tpu.memory_space<vmem>>, vector<24x60xf32>
    %cst_12 = arith.constant dense<0.000000e+00> : vector<32x60xf32>
    %11 = tpu.matmul %9, %10, %cst_12 {dimension_numbers = #tpu.dot_dimension_numbers<[1], [0], [0], [1], [0, 0, 1, 1], [], []>} : vector<32x24xf32>, vector<24x60xf32>, vector<32x60xf32> -> vector<32x60xf32>
    %c0_13 = arith.constant 0 : index
    %c0_14 = arith.constant 0 : index
    %12 = vector.load %arg2[%c0_13, %c0_14] : memref<1x60xf32, #tpu.memory_space<vmem>>, vector<1x60xf32>
    %13 = vector.broadcast %12 : vector<1x60xf32> to vector<32x60xf32>
    %14 = arith.addf %11, %13 : vector<32x60xf32>
    %cst_15 = arith.constant 0.000000e+00 : f32
    %15 = vector.broadcast %cst_15 : f32 to vector<32x60xf32>
    %16 = arith.maximumf %14, %15 : vector<32x60xf32>
    %cst_16 = arith.constant 0.000000e+00 : f32
    %17 = vector.broadcast %cst_16 : f32 to vector<18x2x60xf32>
    %c0_17 = arith.constant 0 : index
    %c0_18 = arith.constant 0 : index
    %c0_19 = arith.constant 0 : index
    %18 = vector.load %arg7[%c0_17, %c0_18, %c0_19] : memref<18x2x60xf32, #tpu.memory_space<vmem>>, vector<18x2x60xf32>
    tpu.vector_store %arg7[%c0_17, %c0_18, %c0_19], %17 {strides = array<i32>} : memref<18x2x60xf32, #tpu.memory_space<vmem>>, vector<18x2x60xf32>,
    %19 = vector.shape_cast %16 : vector<32x60xf32> to vector<16x2x60xf32>
    %c1_20 = arith.constant 1 : index
    %c0_21 = arith.constant 0 : index
    %c0_22 = arith.constant 0 : index
    %20 = vector.load %arg7[%c1_20, %c0_21, %c0_22] : memref<18x2x60xf32, #tpu.memory_space<vmem>>, vector<16x2x60xf32>
    tpu.vector_store %arg7[%c1_20, %c0_21, %c0_22], %19 {strides = array<i32>} : memref<18x2x60xf32, #tpu.memory_space<vmem>>, vector<16x2x60xf32>,
    %c0_23 = arith.constant 0 : index
    %c0_24 = arith.constant 0 : index
    %c0_25 = arith.constant 0 : index
    %21 = vector.load %arg7[%c0_23, %c0_24, %c0_25] : memref<18x2x60xf32, #tpu.memory_space<vmem>>, vector<18x2x60xf32>
    %22 = vector.extract_strided_slice %21 {offsets = [0, 0, 0], sizes = [16, 2, 60], strides = [1, 1, 1]} : vector<18x2x60xf32> to vector<16x2x60xf32>
    %23 = vector.extract_strided_slice %21 {offsets = [1, 0, 0], sizes = [16, 2, 60], strides = [1, 1, 1]} : vector<18x2x60xf32> to vector<16x2x60xf32>
    %24 = vector.extract_strided_slice %21 {offsets = [2, 0, 0], sizes = [16, 2, 60], strides = [1, 1, 1]} : vector<18x2x60xf32> to vector<16x2x60xf32>
    %25 = tpu.concatenate %22, %23, %24 in 2 : vector<16x2x60xf32>, vector<16x2x60xf32>, vector<16x2x60xf32> -> vector<16x2x180xf32>
    %26 = vector.shape_cast %25 : vector<16x2x180xf32> to vector<32x180xf32>
    %c0_26 = arith.constant 0 : index
    %c0_27 = arith.constant 0 : index
    %27 = vector.load %arg3[%c0_26, %c0_27] : memref<180x60xf32, #tpu.memory_space<vmem>>, vector<180x60xf32>
    %cst_28 = arith.constant dense<0.000000e+00> : vector<32x60xf32>
    %28 = tpu.matmul %26, %27, %cst_28 {dimension_numbers = #tpu.dot_dimension_numbers<[1], [0], [0], [1], [0, 0, 1, 1], [], []>} : vector<32x180xf32>, vector<180x60xf32>, vector<32x60xf32> -> vector<32x60xf32>
    %c0_29 = arith.constant 0 : index
    %c0_30 = arith.constant 0 : index
    %29 = vector.load %arg4[%c0_29, %c0_30] : memref<1x60xf32, #tpu.memory_space<vmem>>, vector<1x60xf32>
    %30 = vector.broadcast %29 : vector<1x60xf32> to vector<32x60xf32>
    %31 = arith.addf %28, %30 : vector<32x60xf32>
    %cst_31 = arith.constant 0.000000e+00 : f32
    %32 = vector.broadcast %cst_31 : f32 to vector<32x60xf32>
    %33 = arith.maximumf %31, %32 : vector<32x60xf32>
    %34 = vector.shape_cast %33 : vector<32x60xf32> to vector<16x2x60xf32>
    %c1_32 = arith.constant 1 : index
    %c0_33 = arith.constant 0 : index
    %c0_34 = arith.constant 0 : index
    %35 = vector.load %arg7[%c1_32, %c0_33, %c0_34] : memref<18x2x60xf32, #tpu.memory_space<vmem>>, vector<16x2x60xf32>
    tpu.vector_store %arg7[%c1_32, %c0_33, %c0_34], %34 {strides = array<i32>} : memref<18x2x60xf32, #tpu.memory_space<vmem>>, vector<16x2x60xf32>,
    %c0_35 = arith.constant 0 : index
    %c0_36 = arith.constant 0 : index
    %c0_37 = arith.constant 0 : index
    %36 = vector.load %arg7[%c0_35, %c0_36, %c0_37] : memref<18x2x60xf32, #tpu.memory_space<vmem>>, vector<18x2x60xf32>
    %37 = vector.extract_strided_slice %36 {offsets = [0, 0, 0], sizes = [16, 2, 60], strides = [1, 1, 1]} : vector<18x2x60xf32> to vector<16x2x60xf32>
    %38 = vector.extract_strided_slice %36 {offsets = [1, 0, 0], sizes = [16, 2, 60], strides = [1, 1, 1]} : vector<18x2x60xf32> to vector<16x2x60xf32>
    %39 = vector.extract_strided_slice %36 {offsets = [2, 0, 0], sizes = [16, 2, 60], strides = [1, 1, 1]} : vector<18x2x60xf32> to vector<16x2x60xf32>
    %40 = tpu.concatenate %37, %38, %39 in 2 : vector<16x2x60xf32>, vector<16x2x60xf32>, vector<16x2x60xf32> -> vector<16x2x180xf32>
    %41 = vector.shape_cast %40 : vector<16x2x180xf32> to vector<32x180xf32>
    %c0_38 = arith.constant 0 : index
    %c0_39 = arith.constant 0 : index
    %42 = vector.load %arg3[%c0_38, %c0_39] : memref<180x60xf32, #tpu.memory_space<vmem>>, vector<180x60xf32>
    %cst_40 = arith.constant dense<0.000000e+00> : vector<32x60xf32>
    %43 = tpu.matmul %41, %42, %cst_40 {dimension_numbers = #tpu.dot_dimension_numbers<[1], [0], [0], [1], [0, 0, 1, 1], [], []>} : vector<32x180xf32>, vector<180x60xf32>, vector<32x60xf32> -> vector<32x60xf32>
    %c0_41 = arith.constant 0 : index
    %c0_42 = arith.constant 0 : index
    %44 = vector.load %arg4[%c0_41, %c0_42] : memref<1x60xf32, #tpu.memory_space<vmem>>, vector<1x60xf32>
    %45 = vector.broadcast %44 : vector<1x60xf32> to vector<32x60xf32>
    %46 = arith.addf %43, %45 : vector<32x60xf32>
    %cst_43 = arith.constant 0.000000e+00 : f32
    %47 = vector.broadcast %cst_43 : f32 to vector<32x60xf32>
    %48 = arith.maximumf %46, %47 : vector<32x60xf32>
    %49 = vector.shape_cast %48 : vector<32x60xf32> to vector<16x2x60xf32>
    %c1_44 = arith.constant 1 : index
    %c0_45 = arith.constant 0 : index
    %c0_46 = arith.constant 0 : index
    %50 = vector.load %arg7[%c1_44, %c0_45, %c0_46] : memref<18x2x60xf32, #tpu.memory_space<vmem>>, vector<16x2x60xf32>
    tpu.vector_store %arg7[%c1_44, %c0_45, %c0_46], %49 {strides = array<i32>} : memref<18x2x60xf32, #tpu.memory_space<vmem>>, vector<16x2x60xf32>,
    %c0_47 = arith.constant 0 : index
    %c0_48 = arith.constant 0 : index
    %c0_49 = arith.constant 0 : index
    %51 = vector.load %arg7[%c0_47, %c0_48, %c0_49] : memref<18x2x60xf32, #tpu.memory_space<vmem>>, vector<18x2x60xf32>
    %52 = vector.extract_strided_slice %51 {offsets = [0, 0, 0], sizes = [16, 2, 60], strides = [1, 1, 1]} : vector<18x2x60xf32> to vector<16x2x60xf32>
    %53 = vector.extract_strided_slice %51 {offsets = [1, 0, 0], sizes = [16, 2, 60], strides = [1, 1, 1]} : vector<18x2x60xf32> to vector<16x2x60xf32>
    %54 = vector.extract_strided_slice %51 {offsets = [2, 0, 0], sizes = [16, 2, 60], strides = [1, 1, 1]} : vector<18x2x60xf32> to vector<16x2x60xf32>
    %55 = tpu.concatenate %52, %53, %54 in 2 : vector<16x2x60xf32>, vector<16x2x60xf32>, vector<16x2x60xf32> -> vector<16x2x180xf32>
    %56 = vector.shape_cast %55 : vector<16x2x180xf32> to vector<32x180xf32>
    %c0_50 = arith.constant 0 : index
    %c0_51 = arith.constant 0 : index
    %57 = vector.load %arg3[%c0_50, %c0_51] : memref<180x60xf32, #tpu.memory_space<vmem>>, vector<180x60xf32>
    %cst_52 = arith.constant dense<0.000000e+00> : vector<32x60xf32>
    %58 = tpu.matmul %56, %57, %cst_52 {dimension_numbers = #tpu.dot_dimension_numbers<[1], [0], [0], [1], [0, 0, 1, 1], [], []>} : vector<32x180xf32>, vector<180x60xf32>, vector<32x60xf32> -> vector<32x60xf32>
    %c0_53 = arith.constant 0 : index
    %c0_54 = arith.constant 0 : index
    %59 = vector.load %arg4[%c0_53, %c0_54] : memref<1x60xf32, #tpu.memory_space<vmem>>, vector<1x60xf32>
    %60 = vector.broadcast %59 : vector<1x60xf32> to vector<32x60xf32>
    %61 = arith.addf %58, %60 : vector<32x60xf32>
    %cst_55 = arith.constant 0.000000e+00 : f32
    %62 = vector.broadcast %cst_55 : f32 to vector<32x60xf32>
    %63 = arith.maximumf %61, %62 : vector<32x60xf32>
    %64 = vector.shape_cast %63 : vector<32x60xf32> to vector<16x2x60xf32>
    %c1_56 = arith.constant 1 : index
    %c0_57 = arith.constant 0 : index
    %c0_58 = arith.constant 0 : index
    %65 = vector.load %arg7[%c1_56, %c0_57, %c0_58] : memref<18x2x60xf32, #tpu.memory_space<vmem>>, vector<16x2x60xf32>
    tpu.vector_store %arg7[%c1_56, %c0_57, %c0_58], %64 {strides = array<i32>} : memref<18x2x60xf32, #tpu.memory_space<vmem>>, vector<16x2x60xf32>,
    %c0_59 = arith.constant 0 : index
    %c0_60 = arith.constant 0 : index
    %c0_61 = arith.constant 0 : index
    %66 = vector.load %arg7[%c0_59, %c0_60, %c0_61] : memref<18x2x60xf32, #tpu.memory_space<vmem>>, vector<18x2x60xf32>
    %67 = vector.extract_strided_slice %66 {offsets = [0, 0, 0], sizes = [16, 2, 60], strides = [1, 1, 1]} : vector<18x2x60xf32> to vector<16x2x60xf32>
    %68 = vector.extract_strided_slice %66 {offsets = [1, 0, 0], sizes = [16, 2, 60], strides = [1, 1, 1]} : vector<18x2x60xf32> to vector<16x2x60xf32>
    %69 = vector.extract_strided_slice %66 {offsets = [2, 0, 0], sizes = [16, 2, 60], strides = [1, 1, 1]} : vector<18x2x60xf32> to vector<16x2x60xf32>
    %70 = tpu.concatenate %67, %68, %69 in 2 : vector<16x2x60xf32>, vector<16x2x60xf32>, vector<16x2x60xf32> -> vector<16x2x180xf32>
    %71 = vector.shape_cast %70 : vector<16x2x180xf32> to vector<32x180xf32>
    %c0_62 = arith.constant 0 : index
    %c0_63 = arith.constant 0 : index
    %72 = vector.load %arg3[%c0_62, %c0_63] : memref<180x60xf32, #tpu.memory_space<vmem>>, vector<180x60xf32>
    %cst_64 = arith.constant dense<0.000000e+00> : vector<32x60xf32>
    %73 = tpu.matmul %71, %72, %cst_64 {dimension_numbers = #tpu.dot_dimension_numbers<[1], [0], [0], [1], [0, 0, 1, 1], [], []>} : vector<32x180xf32>, vector<180x60xf32>, vector<32x60xf32> -> vector<32x60xf32>
    %c0_65 = arith.constant 0 : index
    %c0_66 = arith.constant 0 : index
    %74 = vector.load %arg4[%c0_65, %c0_66] : memref<1x60xf32, #tpu.memory_space<vmem>>, vector<1x60xf32>
    %75 = vector.broadcast %74 : vector<1x60xf32> to vector<32x60xf32>
    %76 = arith.addf %73, %75 : vector<32x60xf32>
    %cst_67 = arith.constant 0.000000e+00 : f32
    %77 = vector.broadcast %cst_67 : f32 to vector<32x60xf32>
    %78 = arith.maximumf %76, %77 : vector<32x60xf32>
    %79 = vector.shape_cast %78 : vector<32x60xf32> to vector<16x2x60xf32>
    %c0_68 = arith.constant 0 : index
    %c0_69 = arith.constant 0 : index
    %c0_70 = arith.constant 0 : index
    %80 = vector.load %arg5[%c0_68, %c0_69, %c0_70] : memref<16x2x60xf32, #tpu.memory_space<vmem>>, vector<16x2x60xf32>
    tpu.vector_store %arg5[%c0_68, %c0_69, %c0_70], %79 {strides = array<i32>} : memref<16x2x60xf32, #tpu.memory_space<vmem>>, vector<16x2x60xf32>,
    return
  }
}

</mosaic_0001>

<llo_original>
// kernel: tpu_custom_call.1
$region0: #{tpu_custom_call.1}
  #allocation0 [shape = 'u32[]', space=smem, size = 0x4, offset = 0x4, fixed_abs, tag = 'smem constant byte address 0x4 - core index']
  #allocation1 [shape = 'u32[144,128]{1,0:T(1,128)}', space=vmem, size = 0x12000, scoped, tag = 'internal scratch']
  #allocation2 [shape = 'f32[18,2,8]{2,1,0:T(2,128)}', space=vmem, size = 0x4800, scoped, tag = 'scratch operand']
  #allocation3 [shape = 'f32[18,2,60]{2,1,0:T(2,128)}', space=vmem, size = 0x4800, scoped, tag = 'scratch operand']
  %s0 = inlined_call_operand.vmem [shape: f32[16,2,8], index: 0, kind: input, shape index: {}]
  %s1 = inlined_call_operand.vmem [shape: f32[24,60], index: 1, kind: input, shape index: {}]
  %s2 = inlined_call_operand.vmem [shape: f32[1,60], index: 2, kind: input, shape index: {}]
  %s3 = inlined_call_operand.vmem [shape: f32[180,60], index: 3, kind: input, shape index: {}]
  %s4 = inlined_call_operand.vmem [shape: f32[1,60], index: 4, kind: input, shape index: {}]
  %s5 = inlined_call_operand.hbm [shape: f32[16,2,60], index: 5, kind: output, shape index: {}]
  %s6 = sld [smem:[#allocation0]]
  $region30: #{tpu_custom_call.1} parent=0
    _
  %s8 = ssub.s32 1, %s6
  %s9 = scalar_select 0, %s8, %s6
  $region1: #{tpu_custom_call.1} parent=0
    #allocation4 [shape = 'u8[16384]{0}', space=vmem, size = 0x4000, scoped, tag = 'output window, operand 0, single buffered']
    #allocation5 [shape = 's32[1]{0}', space=sflag, size = 0x4, scoped, tag = 'scoped memory for tpu_custom_call.1']
    %10 = vsyncpa [#allocation5], 0
    // Predicated region
    $region2: #{tpu_custom_call.1} parent=1 // pred_check
      _
    $region3: #{tpu_custom_call.1} parent=1 // pred_check_branch
      %12 = sbr.rel (0) target = $region5
    $region4: #{tpu_custom_call.1} parent=1 // pred_region
      _
    $region5: #{tpu_custom_call.1} parent=1 // pred_fallthru
      _
    // Predicated region
    $region6: #{tpu_custom_call.1} parent=1 // pred_check
      _
    $region7: #{tpu_custom_call.1} parent=1 // pred_check_branch
      %14 = sbr.rel (0) target = $region9
    $region8: #{tpu_custom_call.1} parent=1 // pred_region
      _
    $region9: #{tpu_custom_call.1} parent=1 // pred_fallthru
      _
    // Predicated region
    $region10: #{tpu_custom_call.1} parent=1 // pred_check
      _
    $region11: #{tpu_custom_call.1} parent=1 // pred_check_branch
      %16 = sbr.rel (0) target = $region13
    $region12: #{tpu_custom_call.1} parent=1 // pred_region
      _
    $region13: #{tpu_custom_call.1} parent=1 // pred_fallthru
      _
    // Predicated region
    $region14: #{tpu_custom_call.1} parent=1 // pred_check
      _
    $region15: #{tpu_custom_call.1} parent=1 // pred_check_branch
      %18 = sbr.rel (0) target = $region17
    $region16: #{tpu_custom_call.1} parent=1 // pred_region
      _
    $region17: #{tpu_custom_call.1} parent=1 // pred_fallthru
      _
    // Predicated region
    $region18: #{tpu_custom_call.1} parent=1 // pred_check
      _
    $region19: #{tpu_custom_call.1} parent=1 // pred_check_branch
      %20 = sbr.rel (0) target = $region21
    $region20: #{tpu_custom_call.1} parent=1 // pred_region
      _
    $region21: #{tpu_custom_call.1} parent=1 // pred_fallthru
      _
    %vm21 = vcmask 58368
    %22 = vst.msk [vmem:[#allocation2] sm:$0x3] %vm21, 0.0
    %23 = vst.msk [vmem:[#allocation2 + $0x2] sm:$0x3] %vm21, 0.0
    %24 = vst.msk [vmem:[#allocation2 + $0x4] sm:$0x3] %vm21, 0.0
    %25 = vst.msk [vmem:[#allocation2 + $0x6] sm:$0x3] %vm21, 0.0
    %26 = vst.msk [vmem:[#allocation2 + $0x8] sm:$0x3] %vm21, 0.0
    %27 = vst.msk [vmem:[#allocation2 + $0xa] sm:$0x3] %vm21, 0.0
    %28 = vst.msk [vmem:[#allocation2 + $0xc] sm:$0x3] %vm21, 0.0
    %29 = vst.msk [vmem:[#allocation2 + $0xe] sm:$0x3] %vm21, 0.0
    %30 = vst.msk [vmem:[#allocation2 + $0x10] sm:$0x3] %vm21, 0.0
    %31 = vst.msk [vmem:[#allocation2 + $0x12] sm:$0x3] %vm21, 0.0
    %32 = vst.msk [vmem:[#allocation2 + $0x14] sm:$0x3] %vm21, 0.0
    %33 = vst.msk [vmem:[#allocation2 + $0x16] sm:$0x3] %vm21, 0.0
    %34 = vst.msk [vmem:[#allocation2 + $0x18] sm:$0x3] %vm21, 0.0
    %35 = vst.msk [vmem:[#allocation2 + $0x1a] sm:$0x3] %vm21, 0.0
    %36 = vst.msk [vmem:[#allocation2 + $0x1c] sm:$0x3] %vm21, 0.0
    %37 = vst.msk [vmem:[#allocation2 + $0x1e] sm:$0x3] %vm21, 0.0
    %38 = vst.msk [vmem:[#allocation2 + $0x20] sm:$0x3] %vm21, 0.0
    %39 = vst.msk [vmem:[#allocation2 + $0x22] sm:$0x3] %vm21, 0.0
    %v40 = vld [vmem:[%s0] sm:$0x3]
    %v41 = vld [vmem:[%s0 + $0x2] sm:$0x3]
    %v42 = vld [vmem:[%s0 + $0x4] sm:$0x3]
    %v43 = vld [vmem:[%s0 + $0x6] sm:$0x3]
    %v44 = vld [vmem:[%s0 + $0x8] sm:$0x3]
    %v45 = vld [vmem:[%s0 + $0xa] sm:$0x3]
    %v46 = vld [vmem:[%s0 + $0xc] sm:$0x3]
    %v47 = vld [vmem:[%s0 + $0xe] sm:$0x3]
    %v48 = vld [vmem:[%s0 + $0x10] sm:$0x3]
    %v49 = vld [vmem:[%s0 + $0x12] sm:$0x3]
    %v50 = vld [vmem:[%s0 + $0x14] sm:$0x3]
    %v51 = vld [vmem:[%s0 + $0x16] sm:$0x3]
    %v52 = vld [vmem:[%s0 + $0x18] sm:$0x3]
    %v53 = vld [vmem:[%s0 + $0x1a] sm:$0x3]
    %v54 = vld [vmem:[%s0 + $0x1c] sm:$0x3]
    %v55 = vld [vmem:[%s0 + $0x1e] sm:$0x3]
    %s56 = scalar_lea.vmem [#allocation2], 2
    %57 = vst.msk [vmem:[%s56] sm:$0x3] %vm21, %v40
    %58 = vst.msk [vmem:[%s56 + $0x2] sm:$0x3] %vm21, %v41
    %59 = vst.msk [vmem:[%s56 + $0x4] sm:$0x3] %vm21, %v42
    %60 = vst.msk [vmem:[%s56 + $0x6] sm:$0x3] %vm21, %v43
    %61 = vst.msk [vmem:[%s56 + $0x8] sm:$0x3] %vm21, %v44
    %62 = vst.msk [vmem:[%s56 + $0xa] sm:$0x3] %vm21, %v45
    %63 = vst.msk [vmem:[%s56 + $0xc] sm:$0x3] %vm21, %v46
    %64 = vst.msk [vmem:[%s56 + $0xe] sm:$0x3] %vm21, %v47
    %65 = vst.msk [vmem:[%s56 + $0x10] sm:$0x3] %vm21, %v48
    %66 = vst.msk [vmem:[%s56 + $0x12] sm:$0x3] %vm21, %v49
    %67 = vst.msk [vmem:[%s56 + $0x14] sm:$0x3] %vm21, %v50
    %68 = vst.msk [vmem:[%s56 + $0x16] sm:$0x3] %vm21, %v51
    %69 = vst.msk [vmem:[%s56 + $0x18] sm:$0x3] %vm21, %v52
    %70 = vst.msk [vmem:[%s56 + $0x1a] sm:$0x3] %vm21, %v53
    %71 = vst.msk [vmem:[%s56 + $0x1c] sm:$0x3] %vm21, %v54
    %72 = vst.msk [vmem:[%s56 + $0x1e] sm:$0x3] %vm21, %v55
    %v73 = vld [vmem:[#allocation2] sm:$0x3]
    %v74 = vld [vmem:[#allocation2 + $0x2] sm:$0x3]
    %v75 = vld [vmem:[#allocation2 + $0x4] sm:$0x3]
    %v76 = vld [vmem:[#allocation2 + $0x6] sm:$0x3]
    %v77 = vld [vmem:[#allocation2 + $0x8] sm:$0x3]
    %v78 = vld [vmem:[#allocation2 + $0xa] sm:$0x3]
    %v79 = vld [vmem:[#allocation2 + $0xc] sm:$0x3]
    %v80 = vld [vmem:[#allocation2 + $0xe] sm:$0x3]
    %v81 = vld [vmem:[#allocation2 + $0x10] sm:$0x3]
    %v82 = vld [vmem:[#allocation2 + $0x12] sm:$0x3]
    %v83 = vld [vmem:[#allocation2 + $0x14] sm:$0x3]
    %v84 = vld [vmem:[#allocation2 + $0x16] sm:$0x3]
    %v85 = vld [vmem:[#allocation2 + $0x18] sm:$0x3]
    %v86 = vld [vmem:[#allocation2 + $0x1a] sm:$0x3]
    %v87 = vld [vmem:[#allocation2 + $0x1c] sm:$0x3]
    %v88 = vld [vmem:[#allocation2 + $0x1e] sm:$0x3]
    %v89 = vld [vmem:[#allocation2 + $0x20] sm:$0x3]
    %v90 = vld [vmem:[#allocation2 + $0x22] sm:$0x3]
    %107 = vrot.lane.b32.xlu0 %v74, 8
    %v108 = vpop.permute.xlu0 %107
    %109 = vrot.lane.b32.xlu0 %v75, 8
    %v110 = vpop.permute.xlu0 %109
    %111 = vrot.lane.b32.xlu0 %v76, 8
    %v112 = vpop.permute.xlu0 %111
    %113 = vrot.lane.b32.xlu0 %v77, 8
    %v114 = vpop.permute.xlu0 %113
    %115 = vrot.lane.b32.xlu0 %v78, 8
    %v116 = vpop.permute.xlu0 %115
    %117 = vrot.lane.b32.xlu0 %v79, 8
    %v118 = vpop.permute.xlu0 %117
    %119 = vrot.lane.b32.xlu0 %v80, 8
    %v120 = vpop.permute.xlu0 %119
    %121 = vrot.lane.b32.xlu0 %v81, 8
    %v122 = vpop.permute.xlu0 %121
    %123 = vrot.lane.b32.xlu0 %v82, 8
    %v124 = vpop.permute.xlu0 %123
    %125 = vrot.lane.b32.xlu0 %v83, 8
    %v126 = vpop.permute.xlu0 %125
    %127 = vrot.lane.b32.xlu0 %v84, 8
    %v128 = vpop.permute.xlu0 %127
    %129 = vrot.lane.b32.xlu0 %v85, 8
    %v130 = vpop.permute.xlu0 %129
    %131 = vrot.lane.b32.xlu0 %v86, 8
    %v132 = vpop.permute.xlu0 %131
    %133 = vrot.lane.b32.xlu0 %v87, 8
    %v134 = vpop.permute.xlu0 %133
    %135 = vrot.lane.b32.xlu0 %v88, 8
    %v136 = vpop.permute.xlu0 %135
    %137 = vrot.lane.b32.xlu0 %v89, 8
    %v138 = vpop.permute.xlu0 %137
    %156 = vrot.lane.b32.xlu0 %v75, 16
    %v157 = vpop.permute.xlu0 %156
    %158 = vrot.lane.b32.xlu0 %v76, 16
    %v159 = vpop.permute.xlu0 %158
    %160 = vrot.lane.b32.xlu0 %v77, 16
    %v161 = vpop.permute.xlu0 %160
    %162 = vrot.lane.b32.xlu0 %v78, 16
    %v163 = vpop.permute.xlu0 %162
    %164 = vrot.lane.b32.xlu0 %v79, 16
    %v165 = vpop.permute.xlu0 %164
    %166 = vrot.lane.b32.xlu0 %v80, 16
    %v167 = vpop.permute.xlu0 %166
    %168 = vrot.lane.b32.xlu0 %v81, 16
    %v169 = vpop.permute.xlu0 %168
    %170 = vrot.lane.b32.xlu0 %v82, 16
    %v171 = vpop.permute.xlu0 %170
    %172 = vrot.lane.b32.xlu0 %v83, 16
    %v173 = vpop.permute.xlu0 %172
    %174 = vrot.lane.b32.xlu0 %v84, 16
    %v175 = vpop.permute.xlu0 %174
    %176 = vrot.lane.b32.xlu0 %v85, 16
    %v177 = vpop.permute.xlu0 %176
    %178 = vrot.lane.b32.xlu0 %v86, 16
    %v179 = vpop.permute.xlu0 %178
    %180 = vrot.lane.b32.xlu0 %v87, 16
    %v181 = vpop.permute.xlu0 %180
    %182 = vrot.lane.b32.xlu0 %v88, 16
    %v183 = vpop.permute.xlu0 %182
    %184 = vrot.lane.b32.xlu0 %v89, 16
    %v185 = vpop.permute.xlu0 %184
    %186 = vrot.lane.b32.xlu0 %v90, 16
    %v187 = vpop.permute.xlu0 %186
    %vm204 = vcmask 64512
    %v205 = vsel %vm204, %v73, %v108
    %v206 = vsel %vm204, %v74, %v110
    %v207 = vsel %vm204, %v75, %v112
    %v208 = vsel %vm204, %v76, %v114
    %v209 = vsel %vm204, %v77, %v116
    %v210 = vsel %vm204, %v78, %v118
    %v211 = vsel %vm204, %v79, %v120
    %v212 = vsel %vm204, %v80, %v122
    %v213 = vsel %vm204, %v81, %v124
    %v214 = vsel %vm204, %v82, %v126
    %v215 = vsel %vm204, %v83, %v128
    %v216 = vsel %vm204, %v84, %v130
    %v217 = vsel %vm204, %v85, %v132
    %v218 = vsel %vm204, %v86, %v134
    %v219 = vsel %vm204, %v87, %v136
    %v220 = vsel %vm204, %v88, %v138
    %vm221 = vcmask 130048
    %v222 = vsel %vm221, %v205, %v157
    %v223 = vsel %vm221, %v206, %v159
    %v224 = vsel %vm221, %v207, %v161
    %v225 = vsel %vm221, %v208, %v163
    %v226 = vsel %vm221, %v209, %v165
    %v227 = vsel %vm221, %v210, %v167
    %v228 = vsel %vm221, %v211, %v169
    %v229 = vsel %vm221, %v212, %v171
    %v230 = vsel %vm221, %v213, %v173
    %v231 = vsel %vm221, %v214, %v175
    %v232 = vsel %vm221, %v215, %v177
    %v233 = vsel %vm221, %v216, %v179
    %v234 = vsel %vm221, %v217, %v181
    %v235 = vsel %vm221, %v218, %v183
    %v236 = vsel %vm221, %v219, %v185
    %v237 = vsel %vm221, %v220, %v187
    %v238 = vld [vmem:[%s1] sm:$0xff]
    %v239 = vld [vmem:[%s1 + $0x8] sm:$0xff]
    %v240 = vld [vmem:[%s1 + $0x10] sm:$0xff]
    %v241 = vld [vmem:[%s2] sm:$0x1]
    %v243 = vlaneseq
    %v244 = vshrl.u32 %v243, 7
    %v245 = vsub.s32 0, %v244
    %v246 = vrot.slane %v241, %v245
    %v264 = vcombine.low %v222, %v223
    %v265 = vcombine.low %v224, %v225
    %v267 = vunpack.c.l.s4 1983009808
    %v268 = vunpack.c.0.s8 %v267
    %v269 = vlaneseq
    %v270 = vshrl.u32 %v269, 7
    %v271 = vsub.s32 %v268, %v270
    %v272 = vrot.slane %v264, %v271
    %v274 = vunpack.c.l.s4 1983009808
    %v275 = vunpack.c.0.s8 %v274
    %v276 = vlaneseq
    %v277 = vshrl.u32 %v276, 7
    %v278 = vsub.s32 %v275, %v277
    %v279 = vrot.slane %v265, %v278
    %v280 = vcombine.low %v272, %v279
    %v281 = vcombine.low %v226, %v227
    %v282 = vcombine.low %v228, %v229
    %v284 = vunpack.c.l.s4 1983009808
    %v285 = vunpack.c.0.s8 %v284
    %v286 = vlaneseq
    %v287 = vshrl.u32 %v286, 7
    %v288 = vsub.s32 %v285, %v287
    %v289 = vrot.slane %v281, %v288
    %v291 = vunpack.c.l.s4 1983009808
    %v292 = vunpack.c.0.s8 %v291
    %v293 = vlaneseq
    %v294 = vshrl.u32 %v293, 7
    %v295 = vsub.s32 %v292, %v294
    %v296 = vrot.slane %v282, %v295
    %v297 = vcombine.low %v289, %v296
    %v298 = vcombine.low %v230, %v231
    %v299 = vcombine.low %v232, %v233
    %v301 = vunpack.c.l.s4 1983009808
    %v302 = vunpack.c.0.s8 %v301
    %v303 = vlaneseq
    %v304 = vshrl.u32 %v303, 7
    %v305 = vsub.s32 %v302, %v304
    %v306 = vrot.slane %v298, %v305
    %v308 = vunpack.c.l.s4 1983009808
    %v309 = vunpack.c.0.s8 %v308
    %v310 = vlaneseq
    %v311 = vshrl.u32 %v310, 7
    %v312 = vsub.s32 %v309, %v311
    %v313 = vrot.slane %v299, %v312
    %v314 = vcombine.low %v306, %v313
    %v315 = vcombine.low %v234, %v235
    %v316 = vcombine.low %v236, %v237
    %v318 = vunpack.c.l.s4 1983009808
    %v319 = vunpack.c.0.s8 %v318
    %v320 = vlaneseq
    %v321 = vshrl.u32 %v320, 7
    %v322 = vsub.s32 %v319, %v321
    %v323 = vrot.slane %v315, %v322
    %v325 = vunpack.c.l.s4 1983009808
    %v326 = vunpack.c.0.s8 %v325
    %v327 = vlaneseq
    %v328 = vshrl.u32 %v327, 7
    %v329 = vsub.s32 %v326, %v328
    %v330 = vrot.slane %v316, %v329
    %v331 = vcombine.low %v323, %v330
    %vm332 = vcmask 195584
    %v333 = vsel %vm332, %v280, 0
    %v335 = vsel %vm332, %v297, 0
    %v337 = vsel %vm332, %v314, 0
    %v339 = vsel %vm332, %v331, 0
    %341 = vmatprep.subr.mxu0 0.0
    %342 = vmatpush1.msra.mxu0 %v238
    %343 = vmatprep.subr.mxu0 0.0
    %344 = vmatpush1.msra.mxu0 %v239
    %345 = vmatprep.subr.mxu0 0.0
    %346 = vmatpush1.msra.mxu0 %v240
    %347 = vmatprep.subr.mxu0 0.0
    %348 = vmatpush1.msra.mxu0 0.0
    %349 = vmatprep.subr.mxu0 0.0
    %350 = vmatpush1.msra.mxu0 0.0
    %351 = vmatprep.subr.mxu0 0.0
    %352 = vmatpush1.msra.mxu0 0.0
    %353 = vmatprep.subr.mxu0 0.0
    %354 = vmatpush1.msra.mxu0 0.0
    %355 = vmatprep.subr.mxu0 0.0
    %356 = vmatpush1.msra.mxu0 0.0
    %357 = vmatprep.subr.mxu0 0.0
    %358 = vmatpush1.msra.mxu0 0.0
    %359 = vmatprep.subr.mxu0 0.0
    %360 = vmatpush1.msra.mxu0 0.0
    %361 = vmatprep.subr.mxu0 0.0
    %362 = vmatpush1.msra.mxu0 0.0
    %363 = vmatprep.subr.mxu0 0.0
    %364 = vmatpush1.msra.mxu0 0.0
    %365 = vmatprep.subr.mxu0 0.0
    %366 = vmatpush1.msra.mxu0 0.0
    %367 = vmatprep.subr.mxu0 0.0
    %368 = vmatpush1.msra.mxu0 0.0
    %369 = vmatprep.subr.mxu0 0.0
    %370 = vmatpush1.msra.mxu0 0.0
    %371 = vmatprep.subr.mxu0 0.0
    %372 = vmatpush1.msra.mxu0 0.0
    %373 = vmatprep.subr.mxu0 0.0
    %374 = vmatpush1.msra.mxu0 0.0
    %375 = vmatprep.subr.mxu0 0.0
    %376 = vmatpush1.msra.mxu0 0.0
    %377 = vmatprep.subr.mxu0 0.0
    %378 = vmatpush1.msra.mxu0 0.0
    %379 = vmatprep.subr.mxu0 0.0
    %380 = vmatpush1.msra.mxu0 0.0
    %381 = vmatprep.subr.mxu0 0.0
    %382 = vmatpush1.msra.mxu0 0.0
    %383 = vmatprep.subr.mxu0 0.0
    %384 = vmatpush1.msra.mxu0 0.0
    %385 = vmatprep.subr.mxu0 0.0
    %386 = vmatpush1.msra.mxu0 0.0
    %387 = vmatprep.subr.mxu0 0.0
    %388 = vmatpush1.msra.mxu0 0.0
    %389 = vmatprep.subr.mxu0 0.0
    %390 = vmatpush1.msra.mxu0 0.0
    %391 = vmatprep.subr.mxu0 0.0
    %392 = vmatpush1.msra.mxu0 0.0
    %393 = vmatprep.subr.mxu0 0.0
    %394 = vmatpush1.msra.mxu0 0.0
    %395 = vmatprep.subr.mxu0 0.0
    %396 = vmatpush1.msra.mxu0 0.0
    %397 = vmatprep.subr.mxu0 0.0
    %398 = vmatpush1.msra.mxu0 0.0
    %399 = vmatprep.subr.mxu0 0.0
    %400 = vmatpush1.msra.mxu0 0.0
    %401 = vmatprep.subr.mxu0 0.0
    %402 = vmatpush1.msra.mxu0 0.0
    %403 = vmatprep.subr.mxu0 0.0
    %404 = vmatpush1.msra.mxu0 0.0
    %405 = vmatprep.mubr.f32.mxu0 0.0
    %406 = vmatmul.mubr.f32.gmra.mrb[0].mxu0 %v333
    %v407 = vpop.f32.mrb[0].mxu0
    %v408 = vadd.f32 %v246, %v407
    %v409 = vpop.f32.mrb[0].mxu0
    %410 = vmatprep.mubr.f32.mxu0 0.0
    %411 = vmatmul.mubr.f32.gmra.mrb[0].mxu0 %v335
    %v412 = vpop.f32.mrb[0].mxu0
    %v413 = vadd.f32 %v246, %v412
    %v414 = vpop.f32.mrb[0].mxu0
    %415 = vmatprep.mubr.f32.mxu0 0.0
    %416 = vmatmul.mubr.f32.gmra.mrb[0].mxu0 %v337
    %v417 = vpop.f32.mrb[0].mxu0
    %v418 = vadd.f32 %v246, %v417
    %v419 = vpop.f32.mrb[0].mxu0
    %420 = vmatprep.mubr.f32.mxu0 0.0
    %421 = vmatmul.mubr.f32.gmra.mrb[0].mxu0 %v339
    %v422 = vpop.f32.mrb[0].mxu0
    %v423 = vadd.f32 %v246, %v422
    %v424 = vpop.f32.mrb[0].mxu0
    %425 = vdwg.mxu0
    %v426 = vmax.f32 %v408, 0.0
    %v427 = vmax.f32 %v413, 0.0
    %v428 = vmax.f32 %v418, 0.0
    %v429 = vmax.f32 %v423, 0.0
    %vm430 = vcmask 484352
    %431 = vst.msk [vmem:[#allocation3] sm:$0x3] %vm430, 0.0
    %432 = vst.msk [vmem:[#allocation3 + $0x2] sm:$0x3] %vm430, 0.0
    %433 = vst.msk [vmem:[#allocation3 + $0x4] sm:$0x3] %vm430, 0.0
    %434 = vst.msk [vmem:[#allocation3 + $0x6] sm:$0x3] %vm430, 0.0
    %435 = vst.msk [vmem:[#allocation3 + $0x8] sm:$0x3] %vm430, 0.0
    %436 = vst.msk [vmem:[#allocation3 + $0xa] sm:$0x3] %vm430, 0.0
    %437 = vst.msk [vmem:[#allocation3 + $0xc] sm:$0x3] %vm430, 0.0
    %438 = vst.msk [vmem:[#allocation3 + $0xe] sm:$0x3] %vm430, 0.0
    %439 = vst.msk [vmem:[#allocation3 + $0x10] sm:$0x3] %vm430, 0.0
    %440 = vst.msk [vmem:[#allocation3 + $0x12] sm:$0x3] %vm430, 0.0
    %441 = vst.msk [vmem:[#allocation3 + $0x14] sm:$0x3] %vm430, 0.0
    %442 = vst.msk [vmem:[#allocation3 + $0x16] sm:$0x3] %vm430, 0.0
    %443 = vst.msk [vmem:[#allocation3 + $0x18] sm:$0x3] %vm430, 0.0
    %444 = vst.msk [vmem:[#allocation3 + $0x1a] sm:$0x3] %vm430, 0.0
    %445 = vst.msk [vmem:[#allocation3 + $0x1c] sm:$0x3] %vm430, 0.0
    %446 = vst.msk [vmem:[#allocation3 + $0x1e] sm:$0x3] %vm430, 0.0
    %447 = vst.msk [vmem:[#allocation3 + $0x20] sm:$0x3] %vm430, 0.0
    %448 = vst.msk [vmem:[#allocation3 + $0x22] sm:$0x3] %vm430, 0.0
    %v453 = vcombine.high %v426, %v426
    %v455 = vunpack.c.l.s4 1983009808
    %v456 = vunpack.c.0.s8 %v455
    %v457 = vlaneseq
    %v458 = vshrl.u32 %v457, 7
    %v459 = vsub.s32 %v456, %v458
    %v460 = vrot.slane %v426, %v459
    %v462 = vunpack.c.l.s4 1983009808
    %v463 = vunpack.c.0.s8 %v462
    %v464 = vlaneseq
    %v465 = vshrl.u32 %v464, 7
    %v466 = vsub.s32 %v463, %v465
    %v467 = vrot.slane %v453, %v466
    %v468 = vcombine.high %v460, %v460
    %v469 = vcombine.high %v467, %v467
    %v470 = vcombine.high %v427, %v427
    %v472 = vunpack.c.l.s4 1983009808
    %v473 = vunpack.c.0.s8 %v472
    %v474 = vlaneseq
    %v475 = vshrl.u32 %v474, 7
    %v476 = vsub.s32 %v473, %v475
    %v477 = vrot.slane %v427, %v476
    %v479 = vunpack.c.l.s4 1983009808
    %v480 = vunpack.c.0.s8 %v479
    %v481 = vlaneseq
    %v482 = vshrl.u32 %v481, 7
    %v483 = vsub.s32 %v480, %v482
    %v484 = vrot.slane %v470, %v483
    %v485 = vcombine.high %v477, %v477
    %v486 = vcombine.high %v484, %v484
    %v487 = vcombine.high %v428, %v428
    %v489 = vunpack.c.l.s4 1983009808
    %v490 = vunpack.c.0.s8 %v489
    %v491 = vlaneseq
    %v492 = vshrl.u32 %v491, 7
    %v493 = vsub.s32 %v490, %v492
    %v494 = vrot.slane %v428, %v493
    %v496 = vunpack.c.l.s4 1983009808
    %v497 = vunpack.c.0.s8 %v496
    %v498 = vlaneseq
    %v499 = vshrl.u32 %v498, 7
    %v500 = vsub.s32 %v497, %v499
    %v501 = vrot.slane %v487, %v500
    %v502 = vcombine.high %v494, %v494
    %v503 = vcombine.high %v501, %v501
    %v504 = vcombine.high %v429, %v429
    %v506 = vunpack.c.l.s4 1983009808
    %v507 = vunpack.c.0.s8 %v506
    %v508 = vlaneseq
    %v509 = vshrl.u32 %v508, 7
    %v510 = vsub.s32 %v507, %v509
    %v511 = vrot.slane %v429, %v510
    %v513 = vunpack.c.l.s4 1983009808
    %v514 = vunpack.c.0.s8 %v513
    %v515 = vlaneseq
    %v516 = vshrl.u32 %v515, 7
    %v517 = vsub.s32 %v514, %v516
    %v518 = vrot.slane %v504, %v517
    %v519 = vcombine.high %v511, %v511
    %v520 = vcombine.high %v518, %v518
    %s537 = scalar_lea.vmem [#allocation3], 2
    %538 = vst.msk [vmem:[%s537] sm:$0x3] %vm430, %v460
    %539 = vst.msk [vmem:[%s537 + $0x2] sm:$0x3] %vm430, %v468
    %540 = vst.msk [vmem:[%s537 + $0x4] sm:$0x3] %vm430, %v467
    %541 = vst.msk [vmem:[%s537 + $0x6] sm:$0x3] %vm430, %v469
    %542 = vst.msk [vmem:[%s537 + $0x8] sm:$0x3] %vm430, %v477
    %543 = vst.msk [vmem:[%s537 + $0xa] sm:$0x3] %vm430, %v485
    %544 = vst.msk [vmem:[%s537 + $0xc] sm:$0x3] %vm430, %v484
    %545 = vst.msk [vmem:[%s537 + $0xe] sm:$0x3] %vm430, %v486
    %546 = vst.msk [vmem:[%s537 + $0x10] sm:$0x3] %vm430, %v494
    %547 = vst.msk [vmem:[%s537 + $0x12] sm:$0x3] %vm430, %v502
    %548 = vst.msk [vmem:[%s537 + $0x14] sm:$0x3] %vm430, %v501
    %549 = vst.msk [vmem:[%s537 + $0x16] sm:$0x3] %vm430, %v503
    %550 = vst.msk [vmem:[%s537 + $0x18] sm:$0x3] %vm430, %v511
    %551 = vst.msk [vmem:[%s537 + $0x1a] sm:$0x3] %vm430, %v519
    %552 = vst.msk [vmem:[%s537 + $0x1c] sm:$0x3] %vm430, %v518
    %553 = vst.msk [vmem:[%s537 + $0x1e] sm:$0x3] %vm430, %v520
    %v554 = vld [vmem:[#allocation3] sm:$0x3]
    %v555 = vld [vmem:[#allocation3 + $0x2] sm:$0x3]
    %v556 = vld [vmem:[#allocation3 + $0x4] sm:$0x3]
    %v557 = vld [vmem:[#allocation3 + $0x6] sm:$0x3]
    %v558 = vld [vmem:[#allocation3 + $0x8] sm:$0x3]
    %v559 = vld [vmem:[#allocation3 + $0xa] sm:$0x3]
    %v560 = vld [vmem:[#allocation3 + $0xc] sm:$0x3]
    %v561 = vld [vmem:[#allocation3 + $0xe] sm:$0x3]
    %v562 = vld [vmem:[#allocation3 + $0x10] sm:$0x3]
    %v563 = vld [vmem:[#allocation3 + $0x12] sm:$0x3]
    %v564 = vld [vmem:[#allocation3 + $0x14] sm:$0x3]
    %v565 = vld [vmem:[#allocation3 + $0x16] sm:$0x3]
    %v566 = vld [vmem:[#allocation3 + $0x18] sm:$0x3]
    %v567 = vld [vmem:[#allocation3 + $0x1a] sm:$0x3]
    %v568 = vld [vmem:[#allocation3 + $0x1c] sm:$0x3]
    %v569 = vld [vmem:[#allocation3 + $0x1e] sm:$0x3]
    %v570 = vld [vmem:[#allocation3 + $0x20] sm:$0x3]
    %v571 = vld [vmem:[#allocation3 + $0x22] sm:$0x3]
    %588 = vrot.lane.b32.xlu0 %v555, 60
    %v589 = vpop.permute.xlu0 %588
    %590 = vrot.lane.b32.xlu0 %v556, 60
    %v591 = vpop.permute.xlu0 %590
    %592 = vrot.lane.b32.xlu0 %v557, 60
    %v593 = vpop.permute.xlu0 %592
    %594 = vrot.lane.b32.xlu0 %v558, 60
    %v595 = vpop.permute.xlu0 %594
    %596 = vrot.lane.b32.xlu0 %v559, 60
    %v597 = vpop.permute.xlu0 %596
    %598 = vrot.lane.b32.xlu0 %v560, 60
    %v599 = vpop.permute.xlu0 %598
    %600 = vrot.lane.b32.xlu0 %v561, 60
    %v601 = vpop.permute.xlu0 %600
    %602 = vrot.lane.b32.xlu0 %v562, 60
    %v603 = vpop.permute.xlu0 %602
    %604 = vrot.lane.b32.xlu0 %v563, 60
    %v605 = vpop.permute.xlu0 %604
    %606 = vrot.lane.b32.xlu0 %v564, 60
    %v607 = vpop.permute.xlu0 %606
    %608 = vrot.lane.b32.xlu0 %v565, 60
    %v609 = vpop.permute.xlu0 %608
    %610 = vrot.lane.b32.xlu0 %v566, 60
    %v611 = vpop.permute.xlu0 %610
    %612 = vrot.lane.b32.xlu0 %v567, 60
    %v613 = vpop.permute.xlu0 %612
    %614 = vrot.lane.b32.xlu0 %v568, 60
    %v615 = vpop.permute.xlu0 %614
    %616 = vrot.lane.b32.xlu0 %v569, 60
    %v617 = vpop.permute.xlu0 %616
    %618 = vrot.lane.b32.xlu0 %v570, 60
    %v619 = vpop.permute.xlu0 %618
    %637 = vrot.lane.b32.xlu0 %v556, 120
    %v638 = vpop.permute.xlu0 %637
    %639 = vrot.lane.b32.xlu0 %v557, 120
    %v640 = vpop.permute.xlu0 %639
    %641 = vrot.lane.b32.xlu0 %v558, 120
    %v642 = vpop.permute.xlu0 %641
    %643 = vrot.lane.b32.xlu0 %v559, 120
    %v644 = vpop.permute.xlu0 %643
    %645 = vrot.lane.b32.xlu0 %v560, 120
    %v646 = vpop.permute.xlu0 %645
    %647 = vrot.lane.b32.xlu0 %v561, 120
    %v648 = vpop.permute.xlu0 %647
    %649 = vrot.lane.b32.xlu0 %v562, 120
    %v650 = vpop.permute.xlu0 %649
    %651 = vrot.lane.b32.xlu0 %v563, 120
    %v652 = vpop.permute.xlu0 %651
    %653 = vrot.lane.b32.xlu0 %v564, 120
    %v654 = vpop.permute.xlu0 %653
    %655 = vrot.lane.b32.xlu0 %v565, 120
    %v656 = vpop.permute.xlu0 %655
    %657 = vrot.lane.b32.xlu0 %v566, 120
    %v658 = vpop.permute.xlu0 %657
    %659 = vrot.lane.b32.xlu0 %v567, 120
    %v660 = vpop.permute.xlu0 %659
    %661 = vrot.lane.b32.xlu0 %v568, 120
    %v662 = vpop.permute.xlu0 %661
    %663 = vrot.lane.b32.xlu0 %v569, 120
    %v664 = vpop.permute.xlu0 %663
    %665 = vrot.lane.b32.xlu0 %v570, 120
    %v666 = vpop.permute.xlu0 %665
    %667 = vrot.lane.b32.xlu0 %v571, 120
    %v668 = vpop.permute.xlu0 %667
    %vm685 = vcmask 490496
    %v686 = vsel %vm685, %v554, %v589
    %v687 = vsel %vm685, %v555, %v591
    %v688 = vsel %vm685, %v556, %v593
    %v689 = vsel %vm685, %v557, %v595
    %v690 = vsel %vm685, %v558, %v597
    %v691 = vsel %vm685, %v559, %v599
    %v692 = vsel %vm685, %v560, %v601
    %v693 = vsel %vm685, %v561, %v603
    %v694 = vsel %vm685, %v562, %v605
    %v695 = vsel %vm685, %v563, %v607
    %v696 = vsel %vm685, %v564, %v609
    %v697 = vsel %vm685, %v565, %v611
    %v698 = vsel %vm685, %v566, %v613
    %v699 = vsel %vm685, %v567, %v615
    %v700 = vsel %vm685, %v568, %v617
    %v701 = vsel %vm685, %v569, %v619
    %vm702 = vcmask 982016
    %v703 = vsel %vm702, %v686, %v638
    %v704 = vsel %vm702, %v687, %v640
    %v705 = vsel %vm702, %v688, %v642
    %v706 = vsel %vm702, %v689, %v644
    %v707 = vsel %vm702, %v690, %v646
    %v708 = vsel %vm702, %v691, %v648
    %v709 = vsel %vm702, %v692, %v650
    %v710 = vsel %vm702, %v693, %v652
    %v711 = vsel %vm702, %v694, %v654
    %v712 = vsel %vm702, %v695, %v656
    %v713 = vsel %vm702, %v696, %v658
    %v714 = vsel %vm702, %v697, %v660
    %v715 = vsel %vm702, %v698, %v662
    %v716 = vsel %vm702, %v699, %v664
    %v717 = vsel %vm702, %v700, %v666
    %v718 = vsel %vm702, %v701, %v668
    %v735 = vcombine.low %v703, %v638
    %v737 = vunpack.c.l.s4 1983009808
    %v738 = vunpack.c.0.s8 %v737
    %v739 = vlaneseq
    %v740 = vshrl.u32 %v739, 7
    %v741 = vsub.s32 %v738, %v740
    %v742 = vrot.slane %v735, %v741
    %v743 = vcombine.low %v704, %v640
    %v745 = vunpack.c.l.s4 1983009808
    %v746 = vunpack.c.0.s8 %v745
    %v747 = vlaneseq
    %v748 = vshrl.u32 %v747, 7
    %v749 = vsub.s32 %v746, %v748
    %v750 = vrot.slane %v743, %v749
    %v751 = vcombine.low %v705, %v642
    %v753 = vunpack.c.l.s4 1983009808
    %v754 = vunpack.c.0.s8 %v753
    %v755 = vlaneseq
    %v756 = vshrl.u32 %v755, 7
    %v757 = vsub.s32 %v754, %v756
    %v758 = vrot.slane %v751, %v757
    %v759 = vcombine.low %v706, %v644
    %v761 = vunpack.c.l.s4 1983009808
    %v762 = vunpack.c.0.s8 %v761
    %v763 = vlaneseq
    %v764 = vshrl.u32 %v763, 7
    %v765 = vsub.s32 %v762, %v764
    %v766 = vrot.slane %v759, %v765
    %v767 = vcombine.low %v707, %v646
    %v769 = vunpack.c.l.s4 1983009808
    %v770 = vunpack.c.0.s8 %v769
    %v771 = vlaneseq
    %v772 = vshrl.u32 %v771, 7
    %v773 = vsub.s32 %v770, %v772
    %v774 = vrot.slane %v767, %v773
    %v775 = vcombine.low %v708, %v648
    %v777 = vunpack.c.l.s4 1983009808
    %v778 = vunpack.c.0.s8 %v777
    %v779 = vlaneseq
    %v780 = vshrl.u32 %v779, 7
    %v781 = vsub.s32 %v778, %v780
    %v782 = vrot.slane %v775, %v781
    %v783 = vcombine.low %v709, %v650
    %v785 = vunpack.c.l.s4 1983009808
    %v786 = vunpack.c.0.s8 %v785
    %v787 = vlaneseq
    %v788 = vshrl.u32 %v787, 7
    %v789 = vsub.s32 %v786, %v788
    %v790 = vrot.slane %v783, %v789
    %v791 = vcombine.low %v710, %v652
    %v793 = vunpack.c.l.s4 1983009808
    %v794 = vunpack.c.0.s8 %v793
    %v795 = vlaneseq
    %v796 = vshrl.u32 %v795, 7
    %v797 = vsub.s32 %v794, %v796
    %v798 = vrot.slane %v791, %v797
    %v799 = vcombine.low %v711, %v654
    %v801 = vunpack.c.l.s4 1983009808
    %v802 = vunpack.c.0.s8 %v801
    %v803 = vlaneseq
    %v804 = vshrl.u32 %v803, 7
    %v805 = vsub.s32 %v802, %v804
    %v806 = vrot.slane %v799, %v805
    %v807 = vcombine.low %v712, %v656
    %v809 = vunpack.c.l.s4 1983009808
    %v810 = vunpack.c.0.s8 %v809
    %v811 = vlaneseq
    %v812 = vshrl.u32 %v811, 7
    %v813 = vsub.s32 %v810, %v812
    %v814 = vrot.slane %v807, %v813
    %v815 = vcombine.low %v713, %v658
    %v817 = vunpack.c.l.s4 1983009808
    %v818 = vunpack.c.0.s8 %v817
    %v819 = vlaneseq
    %v820 = vshrl.u32 %v819, 7
    %v821 = vsub.s32 %v818, %v820
    %v822 = vrot.slane %v815, %v821
    %v823 = vcombine.low %v714, %v660
    %v825 = vunpack.c.l.s4 1983009808
    %v826 = vunpack.c.0.s8 %v825
    %v827 = vlaneseq
    %v828 = vshrl.u32 %v827, 7
    %v829 = vsub.s32 %v826, %v828
    %v830 = vrot.slane %v823, %v829
    %v831 = vcombine.low %v715, %v662
    %v833 = vunpack.c.l.s4 1983009808
    %v834 = vunpack.c.0.s8 %v833
    %v835 = vlaneseq
    %v836 = vshrl.u32 %v835, 7
    %v837 = vsub.s32 %v834, %v836
    %v838 = vrot.slane %v831, %v837
    %v839 = vcombine.low %v716, %v664
    %v841 = vunpack.c.l.s4 1983009808
    %v842 = vunpack.c.0.s8 %v841
    %v843 = vlaneseq
    %v844 = vshrl.u32 %v843, 7
    %v845 = vsub.s32 %v842, %v844
    %v846 = vrot.slane %v839, %v845
    %v847 = vcombine.low %v717, %v666
    %v849 = vunpack.c.l.s4 1983009808
    %v850 = vunpack.c.0.s8 %v849
    %v851 = vlaneseq
    %v852 = vshrl.u32 %v851, 7
    %v853 = vsub.s32 %v850, %v852
    %v854 = vrot.slane %v847, %v853
    %v855 = vcombine.low %v718, %v668
    %v857 = vunpack.c.l.s4 1983009808
    %v858 = vunpack.c.0.s8 %v857
    %v859 = vlaneseq
    %v860 = vshrl.u32 %v859, 7
    %v861 = vsub.s32 %v858, %v860
    %v862 = vrot.slane %v855, %v861
    %v863 = vld [vmem:[%s3] sm:$0xff]
    %v864 = vld [vmem:[%s3 + $0x8] sm:$0xff]
    %v865 = vld [vmem:[%s3 + $0x10] sm:$0xff]
    %v866 = vld [vmem:[%s3 + $0x18] sm:$0xff]
    %v867 = vld [vmem:[%s3 + $0x20] sm:$0xff]
    %v868 = vld [vmem:[%s3 + $0x28] sm:$0xff]
    %v869 = vld [vmem:[%s3 + $0x30] sm:$0xff]
    %v870 = vld [vmem:[%s3 + $0x38] sm:$0xff]
    %v871 = vld [vmem:[%s3 + $0x40] sm:$0xff]
    %v872 = vld [vmem:[%s3 + $0x48] sm:$0xff]
    %v873 = vld [vmem:[%s3 + $0x50] sm:$0xff]
    %v874 = vld [vmem:[%s3 + $0x58] sm:$0xff]
    %v875 = vld [vmem:[%s3 + $0x60] sm:$0xff]
    %v876 = vld [vmem:[%s3 + $0x68] sm:$0xff]
    %v877 = vld [vmem:[%s3 + $0x70] sm:$0xff]
    %v878 = vld [vmem:[%s3 + $0x78] sm:$0xff]
    %v879 = vld [vmem:[%s3 + $0x80] sm:$0xff]
    %v880 = vld [vmem:[%s3 + $0x88] sm:$0xff]
    %v881 = vld [vmem:[%s3 + $0x90] sm:$0xff]
    %v882 = vld [vmem:[%s3 + $0x98] sm:$0xff]
    %v883 = vld [vmem:[%s3 + $0xa0] sm:$0xff]
    %v884 = vld [vmem:[%s3 + $0xa8] sm:$0xff]
    %v885 = vld [vmem:[%s3 + $0xb0] sm:$0xf]
    %v886 = vld [vmem:[%s4] sm:$0x1]
    %v888 = vlaneseq
    %v889 = vshrl.u32 %v888, 7
    %v890 = vsub.s32 0, %v889
    %v891 = vrot.slane %v886, %v890
    %v893 = vcombine.low %v742, %v750
    %v894 = vcombine.low %v758, %v766
    %v896 = vunpack.c.l.s4 1983009808
    %v897 = vunpack.c.0.s8 %v896
    %v898 = vlaneseq
    %v899 = vshrl.u32 %v898, 7
    %v900 = vsub.s32 %v897, %v899
    %v901 = vrot.slane %v893, %v900
    %v903 = vunpack.c.l.s4 1983009808
    %v904 = vunpack.c.0.s8 %v903
    %v905 = vlaneseq
    %v906 = vshrl.u32 %v905, 7
    %v907 = vsub.s32 %v904, %v906
    %v908 = vrot.slane %v894, %v907
    %v909 = vcombine.low %v901, %v908
    %v910 = vcombine.high %v901, %v908
    %v911 = vcombine.low %v774, %v782
    %v912 = vcombine.low %v790, %v798
    %v914 = vunpack.c.l.s4 1983009808
    %v915 = vunpack.c.0.s8 %v914
    %v916 = vlaneseq
    %v917 = vshrl.u32 %v916, 7
    %v918 = vsub.s32 %v915, %v917
    %v919 = vrot.slane %v911, %v918
    %v921 = vunpack.c.l.s4 1983009808
    %v922 = vunpack.c.0.s8 %v921
    %v923 = vlaneseq
    %v924 = vshrl.u32 %v923, 7
    %v925 = vsub.s32 %v922, %v924
    %v926 = vrot.slane %v912, %v925
    %v927 = vcombine.low %v919, %v926
    %v928 = vcombine.high %v919, %v926
    %v929 = vcombine.low %v806, %v814
    %v930 = vcombine.low %v822, %v830
    %v932 = vunpack.c.l.s4 1983009808
    %v933 = vunpack.c.0.s8 %v932
    %v934 = vlaneseq
    %v935 = vshrl.u32 %v934, 7
    %v936 = vsub.s32 %v933, %v935
    %v937 = vrot.slane %v929, %v936
    %v939 = vunpack.c.l.s4 1983009808
    %v940 = vunpack.c.0.s8 %v939
    %v941 = vlaneseq
    %v942 = vshrl.u32 %v941, 7
    %v943 = vsub.s32 %v940, %v942
    %v944 = vrot.slane %v930, %v943
    %v945 = vcombine.low %v937, %v944
    %v946 = vcombine.high %v937, %v944
    %v947 = vcombine.low %v838, %v846
    %v948 = vcombine.low %v854, %v862
    %v950 = vunpack.c.l.s4 1983009808
    %v951 = vunpack.c.0.s8 %v950
    %v952 = vlaneseq
    %v953 = vshrl.u32 %v952, 7
    %v954 = vsub.s32 %v951, %v953
    %v955 = vrot.slane %v947, %v954
    %v957 = vunpack.c.l.s4 1983009808
    %v958 = vunpack.c.0.s8 %v957
    %v959 = vlaneseq
    %v960 = vshrl.u32 %v959, 7
    %v961 = vsub.s32 %v958, %v960
    %v962 = vrot.slane %v948, %v961
    %v963 = vcombine.low %v955, %v962
    %v964 = vcombine.high %v955, %v962
    %vm969 = vcmask 424960
    %v970 = vsel %vm969, %v910, 0
    %v972 = vsel %vm969, %v928, 0
    %v974 = vsel %vm969, %v946, 0
    %v976 = vsel %vm969, %v964, 0
    %vm978 = vcmask 1043456
    %v980 = vsel %vm978, %v885, 0
    %982 = vmatprep.subr.mxu0 0.0
    %983 = vmatpush1.msra.mxu0 %v863
    %984 = vmatprep.subr.mxu0 0.0
    %985 = vmatpush1.msra.mxu0 %v864
    %986 = vmatprep.subr.mxu0 0.0
    %987 = vmatpush1.msra.mxu0 %v865
    %988 = vmatprep.subr.mxu0 0.0
    %989 = vmatpush1.msra.mxu0 %v866
    %990 = vmatprep.subr.mxu0 0.0
    %991 = vmatpush1.msra.mxu0 %v867
    %992 = vmatprep.subr.mxu0 0.0
    %993 = vmatpush1.msra.mxu0 %v868
    %994 = vmatprep.subr.mxu0 0.0
    %995 = vmatpush1.msra.mxu0 %v869
    %996 = vmatprep.subr.mxu0 0.0
    %997 = vmatpush1.msra.mxu0 %v870
    %998 = vmatprep.subr.mxu0 0.0
    %999 = vmatpush1.msra.mxu0 %v871
    %1000 = vmatprep.subr.mxu0 0.0
    %1001 = vmatpush1.msra.mxu0 %v872
    %1002 = vmatprep.subr.mxu0 0.0
    %1003 = vmatpush1.msra.mxu0 %v873
    %1004 = vmatprep.subr.mxu0 0.0
    %1005 = vmatpush1.msra.mxu0 %v874
    %1006 = vmatprep.subr.mxu0 0.0
    %1007 = vmatpush1.msra.mxu0 %v875
    %1008 = vmatprep.subr.mxu0 0.0
    %1009 = vmatpush1.msra.mxu0 %v876
    %1010 = vmatprep.subr.mxu0 0.0
    %1011 = vmatpush1.msra.mxu0 %v877
    %1012 = vmatprep.subr.mxu0 0.0
    %1013 = vmatpush1.msra.mxu0 %v878
    %1014 = vmatprep.subr.mxu0 0.0
    %1015 = vmatpush1.msra.mxu0 %v879
    %1016 = vmatprep.subr.mxu0 0.0
    %1017 = vmatpush1.msra.mxu0 %v880
    %1018 = vmatprep.subr.mxu0 0.0
    %1019 = vmatpush1.msra.mxu0 %v881
    %1020 = vmatprep.subr.mxu0 0.0
    %1021 = vmatpush1.msra.mxu0 %v882
    %1022 = vmatprep.subr.mxu0 0.0
    %1023 = vmatpush1.msra.mxu0 %v883
    %1024 = vmatprep.subr.mxu0 0.0
    %1025 = vmatpush1.msra.mxu0 %v884
    %1026 = vmatprep.subr.mxu0 0.0
    %1027 = vmatpush1.msra.mxu0 %v980
    %1028 = vmatprep.subr.mxu0 0.0
    %1029 = vmatpush1.msra.mxu0 0.0
    %1030 = vmatprep.subr.mxu0 0.0
    %1031 = vmatpush1.msra.mxu0 0.0
    %1032 = vmatprep.subr.mxu0 0.0
    %1033 = vmatpush1.msra.mxu0 0.0
    %1034 = vmatprep.subr.mxu0 0.0
    %1035 = vmatpush1.msra.mxu0 0.0
    %1036 = vmatprep.subr.mxu0 0.0
    %1037 = vmatpush1.msra.mxu0 0.0
    %1038 = vmatprep.subr.mxu0 0.0
    %1039 = vmatpush1.msra.mxu0 0.0
    %1040 = vmatprep.subr.mxu0 0.0
    %1041 = vmatpush1.msra.mxu0 0.0
    %1042 = vmatprep.subr.mxu0 0.0
    %1043 = vmatpush1.msra.mxu0 0.0
    %1044 = vmatprep.subr.mxu0 0.0
    %1045 = vmatpush1.msra.mxu0 0.0
    %1046 = vmatprep.mubr.f32.mxu0 %v970
    %1047 = vmatmul.mubr.f32.gmra.mrb[0].mxu0 %v909
    %v1048 = vpop.f32.mrb[0].mxu0
    %v1049 = vadd.f32 %v891, %v1048
    %v1050 = vpop.f32.mrb[0].mxu0
    %1051 = vmatprep.mubr.f32.mxu0 %v972
    %1052 = vmatmul.mubr.f32.gmra.mrb[0].mxu0 %v927
    %v1053 = vpop.f32.mrb[0].mxu0
    %v1054 = vadd.f32 %v891, %v1053
    %v1055 = vpop.f32.mrb[0].mxu0
    %1056 = vmatprep.mubr.f32.mxu0 %v974
    %1057 = vmatmul.mubr.f32.gmra.mrb[0].mxu0 %v945
    %v1058 = vpop.f32.mrb[0].mxu0
    %v1059 = vadd.f32 %v891, %v1058
    %v1060 = vpop.f32.mrb[0].mxu0
    %1061 = vmatprep.mubr.f32.mxu0 %v976
    %1062 = vmatmul.mubr.f32.gmra.mrb[0].mxu0 %v963
    %v1063 = vpop.f32.mrb[0].mxu0
    %v1064 = vadd.f32 %v891, %v1063
    %v1065 = vpop.f32.mrb[0].mxu0
    %1066 = vdwg.mxu0
    %v1067 = vmax.f32 %v1049, 0.0
    %v1068 = vmax.f32 %v1054, 0.0
    %v1069 = vmax.f32 %v1059, 0.0
    %v1070 = vmax.f32 %v1064, 0.0
    %v1075 = vcombine.high %v1067, %v1067
    %v1077 = vunpack.c.l.s4 1983009808
    %v1078 = vunpack.c.0.s8 %v1077
    %v1079 = vlaneseq
    %v1080 = vshrl.u32 %v1079, 7
    %v1081 = vsub.s32 %v1078, %v1080
    %v1082 = vrot.slane %v1067, %v1081
    %v1084 = vunpack.c.l.s4 1983009808
    %v1085 = vunpack.c.0.s8 %v1084
    %v1086 = vlaneseq
    %v1087 = vshrl.u32 %v1086, 7
    %v1088 = vsub.s32 %v1085, %v1087
    %v1089 = vrot.slane %v1075, %v1088
    %v1090 = vcombine.high %v1082, %v1082
    %v1091 = vcombine.high %v1089, %v1089
    %v1092 = vcombine.high %v1068, %v1068
    %v1094 = vunpack.c.l.s4 1983009808
    %v1095 = vunpack.c.0.s8 %v1094
    %v1096 = vlaneseq
    %v1097 = vshrl.u32 %v1096, 7
    %v1098 = vsub.s32 %v1095, %v1097
    %v1099 = vrot.slane %v1068, %v1098
    %v1101 = vunpack.c.l.s4 1983009808
    %v1102 = vunpack.c.0.s8 %v1101
    %v1103 = vlaneseq
    %v1104 = vshrl.u32 %v1103, 7
    %v1105 = vsub.s32 %v1102, %v1104
    %v1106 = vrot.slane %v1092, %v1105
    %v1107 = vcombine.high %v1099, %v1099
    %v1108 = vcombine.high %v1106, %v1106
    %v1109 = vcombine.high %v1069, %v1069
    %v1111 = vunpack.c.l.s4 1983009808
    %v1112 = vunpack.c.0.s8 %v1111
    %v1113 = vlaneseq
    %v1114 = vshrl.u32 %v1113, 7
    %v1115 = vsub.s32 %v1112, %v1114
    %v1116 = vrot.slane %v1069, %v1115
    %v1118 = vunpack.c.l.s4 1983009808
    %v1119 = vunpack.c.0.s8 %v1118
    %v1120 = vlaneseq
    %v1121 = vshrl.u32 %v1120, 7
    %v1122 = vsub.s32 %v1119, %v1121
    %v1123 = vrot.slane %v1109, %v1122
    %v1124 = vcombine.high %v1116, %v1116
    %v1125 = vcombine.high %v1123, %v1123
    %v1126 = vcombine.high %v1070, %v1070
    %v1128 = vunpack.c.l.s4 1983009808
    %v1129 = vunpack.c.0.s8 %v1128
    %v1130 = vlaneseq
    %v1131 = vshrl.u32 %v1130, 7
    %v1132 = vsub.s32 %v1129, %v1131
    %v1133 = vrot.slane %v1070, %v1132
    %v1135 = vunpack.c.l.s4 1983009808
    %v1136 = vunpack.c.0.s8 %v1135
    %v1137 = vlaneseq
    %v1138 = vshrl.u32 %v1137, 7
    %v1139 = vsub.s32 %v1136, %v1138
    %v1140 = vrot.slane %v1126, %v1139
    %v1141 = vcombine.high %v1133, %v1133
    %v1142 = vcombine.high %v1140, %v1140
    %1159 = vst.msk [vmem:[%s537] sm:$0x3] %vm430, %v1082
    %1160 = vst.msk [vmem:[%s537 + $0x2] sm:$0x3] %vm430, %v1090
    %1161 = vst.msk [vmem:[%s537 + $0x4] sm:$0x3] %vm430, %v1089
    %1162 = vst.msk [vmem:[%s537 + $0x6] sm:$0x3] %vm430, %v1091
    %1163 = vst.msk [vmem:[%s537 + $0x8] sm:$0x3] %vm430, %v1099
    %1164 = vst.msk [vmem:[%s537 + $0xa] sm:$0x3] %vm430, %v1107
    %1165 = vst.msk [vmem:[%s537 + $0xc] sm:$0x3] %vm430, %v1106
    %1166 = vst.msk [vmem:[%s537 + $0xe] sm:$0x3] %vm430, %v1108
    %1167 = vst.msk [vmem:[%s537 + $0x10] sm:$0x3] %vm430, %v1116
    %1168 = vst.msk [vmem:[%s537 + $0x12] sm:$0x3] %vm430, %v1124
    %1169 = vst.msk [vmem:[%s537 + $0x14] sm:$0x3] %vm430, %v1123
    %1170 = vst.msk [vmem:[%s537 + $0x16] sm:$0x3] %vm430, %v1125
    %1171 = vst.msk [vmem:[%s537 + $0x18] sm:$0x3] %vm430, %v1133
    %1172 = vst.msk [vmem:[%s537 + $0x1a] sm:$0x3] %vm430, %v1141
    %1173 = vst.msk [vmem:[%s537 + $0x1c] sm:$0x3] %vm430, %v1140
    %1174 = vst.msk [vmem:[%s537 + $0x1e] sm:$0x3] %vm430, %v1142
    %v1175 = vld [vmem:[#allocation3] sm:$0x3]
    %v1176 = vld [vmem:[#allocation3 + $0x2] sm:$0x3]
    %v1177 = vld [vmem:[#allocation3 + $0x4] sm:$0x3]
    %v1178 = vld [vmem:[#allocation3 + $0x6] sm:$0x3]
    %v1179 = vld [vmem:[#allocation3 + $0x8] sm:$0x3]
    %v1180 = vld [vmem:[#allocation3 + $0xa] sm:$0x3]
    %v1181 = vld [vmem:[#allocation3 + $0xc] sm:$0x3]
    %v1182 = vld [vmem:[#allocation3 + $0xe] sm:$0x3]
    %v1183 = vld [vmem:[#allocation3 + $0x10] sm:$0x3]
    %v1184 = vld [vmem:[#allocation3 + $0x12] sm:$0x3]
    %v1185 = vld [vmem:[#allocation3 + $0x14] sm:$0x3]
    %v1186 = vld [vmem:[#allocation3 + $0x16] sm:$0x3]
    %v1187 = vld [vmem:[#allocation3 + $0x18] sm:$0x3]
    %v1188 = vld [vmem:[#allocation3 + $0x1a] sm:$0x3]
    %v1189 = vld [vmem:[#allocation3 + $0x1c] sm:$0x3]
    %v1190 = vld [vmem:[#allocation3 + $0x1e] sm:$0x3]
    %v1191 = vld [vmem:[#allocation3 + $0x20] sm:$0x3]
    %v1192 = vld [vmem:[#allocation3 + $0x22] sm:$0x3]
    %1209 = vrot.lane.b32.xlu0 %v1176, 60
    %v1210 = vpop.permute.xlu0 %1209
    %1211 = vrot.lane.b32.xlu0 %v1177, 60
    %v1212 = vpop.permute.xlu0 %1211
    %1213 = vrot.lane.b32.xlu0 %v1178, 60
    %v1214 = vpop.permute.xlu0 %1213
    %1215 = vrot.lane.b32.xlu0 %v1179, 60
    %v1216 = vpop.permute.xlu0 %1215
    %1217 = vrot.lane.b32.xlu0 %v1180, 60
    %v1218 = vpop.permute.xlu0 %1217
    %1219 = vrot.lane.b32.xlu0 %v1181, 60
    %v1220 = vpop.permute.xlu0 %1219
    %1221 = vrot.lane.b32.xlu0 %v1182, 60
    %v1222 = vpop.permute.xlu0 %1221
    %1223 = vrot.lane.b32.xlu0 %v1183, 60
    %v1224 = vpop.permute.xlu0 %1223
    %1225 = vrot.lane.b32.xlu0 %v1184, 60
    %v1226 = vpop.permute.xlu0 %1225
    %1227 = vrot.lane.b32.xlu0 %v1185, 60
    %v1228 = vpop.permute.xlu0 %1227
    %1229 = vrot.lane.b32.xlu0 %v1186, 60
    %v1230 = vpop.permute.xlu0 %1229
    %1231 = vrot.lane.b32.xlu0 %v1187, 60
    %v1232 = vpop.permute.xlu0 %1231
    %1233 = vrot.lane.b32.xlu0 %v1188, 60
    %v1234 = vpop.permute.xlu0 %1233
    %1235 = vrot.lane.b32.xlu0 %v1189, 60
    %v1236 = vpop.permute.xlu0 %1235
    %1237 = vrot.lane.b32.xlu0 %v1190, 60
    %v1238 = vpop.permute.xlu0 %1237
    %1239 = vrot.lane.b32.xlu0 %v1191, 60
    %v1240 = vpop.permute.xlu0 %1239
    %1258 = vrot.lane.b32.xlu0 %v1177, 120
    %v1259 = vpop.permute.xlu0 %1258
    %1260 = vrot.lane.b32.xlu0 %v1178, 120
    %v1261 = vpop.permute.xlu0 %1260
    %1262 = vrot.lane.b32.xlu0 %v1179, 120
    %v1263 = vpop.permute.xlu0 %1262
    %1264 = vrot.lane.b32.xlu0 %v1180, 120
    %v1265 = vpop.permute.xlu0 %1264
    %1266 = vrot.lane.b32.xlu0 %v1181, 120
    %v1267 = vpop.permute.xlu0 %1266
    %1268 = vrot.lane.b32.xlu0 %v1182, 120
    %v1269 = vpop.permute.xlu0 %1268
    %1270 = vrot.lane.b32.xlu0 %v1183, 120
    %v1271 = vpop.permute.xlu0 %1270
    %1272 = vrot.lane.b32.xlu0 %v1184, 120
    %v1273 = vpop.permute.xlu0 %1272
    %1274 = vrot.lane.b32.xlu0 %v1185, 120
    %v1275 = vpop.permute.xlu0 %1274
    %1276 = vrot.lane.b32.xlu0 %v1186, 120
    %v1277 = vpop.permute.xlu0 %1276
    %1278 = vrot.lane.b32.xlu0 %v1187, 120
    %v1279 = vpop.permute.xlu0 %1278
    %1280 = vrot.lane.b32.xlu0 %v1188, 120
    %v1281 = vpop.permute.xlu0 %1280
    %1282 = vrot.lane.b32.xlu0 %v1189, 120
    %v1283 = vpop.permute.xlu0 %1282
    %1284 = vrot.lane.b32.xlu0 %v1190, 120
    %v1285 = vpop.permute.xlu0 %1284
    %1286 = vrot.lane.b32.xlu0 %v1191, 120
    %v1287 = vpop.permute.xlu0 %1286
    %1288 = vrot.lane.b32.xlu0 %v1192, 120
    %v1289 = vpop.permute.xlu0 %1288
    %v1306 = vsel %vm685, %v1175, %v1210
    %v1307 = vsel %vm685, %v1176, %v1212
    %v1308 = vsel %vm685, %v1177, %v1214
    %v1309 = vsel %vm685, %v1178, %v1216
    %v1310 = vsel %vm685, %v1179, %v1218
    %v1311 = vsel %vm685, %v1180, %v1220
    %v1312 = vsel %vm685, %v1181, %v1222
    %v1313 = vsel %vm685, %v1182, %v1224
    %v1314 = vsel %vm685, %v1183, %v1226
    %v1315 = vsel %vm685, %v1184, %v1228
    %v1316 = vsel %vm685, %v1185, %v1230
    %v1317 = vsel %vm685, %v1186, %v1232
    %v1318 = vsel %vm685, %v1187, %v1234
    %v1319 = vsel %vm685, %v1188, %v1236
    %v1320 = vsel %vm685, %v1189, %v1238
    %v1321 = vsel %vm685, %v1190, %v1240
    %v1322 = vsel %vm702, %v1306, %v1259
    %v1323 = vsel %vm702, %v1307, %v1261
    %v1324 = vsel %vm702, %v1308, %v1263
    %v1325 = vsel %vm702, %v1309, %v1265
    %v1326 = vsel %vm702, %v1310, %v1267
    %v1327 = vsel %vm702, %v1311, %v1269
    %v1328 = vsel %vm702, %v1312, %v1271
    %v1329 = vsel %vm702, %v1313, %v1273
    %v1330 = vsel %vm702, %v1314, %v1275
    %v1331 = vsel %vm702, %v1315, %v1277
    %v1332 = vsel %vm702, %v1316, %v1279
    %v1333 = vsel %vm702, %v1317, %v1281
    %v1334 = vsel %vm702, %v1318, %v1283
    %v1335 = vsel %vm702, %v1319, %v1285
    %v1336 = vsel %vm702, %v1320, %v1287
    %v1337 = vsel %vm702, %v1321, %v1289
    %v1354 = vcombine.low %v1322, %v1259
    %v1356 = vunpack.c.l.s4 1983009808
    %v1357 = vunpack.c.0.s8 %v1356
    %v1358 = vlaneseq
    %v1359 = vshrl.u32 %v1358, 7
    %v1360 = vsub.s32 %v1357, %v1359
    %v1361 = vrot.slane %v1354, %v1360
    %v1362 = vcombine.low %v1323, %v1261
    %v1364 = vunpack.c.l.s4 1983009808
    %v1365 = vunpack.c.0.s8 %v1364
    %v1366 = vlaneseq
    %v1367 = vshrl.u32 %v1366, 7
    %v1368 = vsub.s32 %v1365, %v1367
    %v1369 = vrot.slane %v1362, %v1368
    %v1370 = vcombine.low %v1324, %v1263
    %v1372 = vunpack.c.l.s4 1983009808
    %v1373 = vunpack.c.0.s8 %v1372
    %v1374 = vlaneseq
    %v1375 = vshrl.u32 %v1374, 7
    %v1376 = vsub.s32 %v1373, %v1375
    %v1377 = vrot.slane %v1370, %v1376
    %v1378 = vcombine.low %v1325, %v1265
    %v1380 = vunpack.c.l.s4 1983009808
    %v1381 = vunpack.c.0.s8 %v1380
    %v1382 = vlaneseq
    %v1383 = vshrl.u32 %v1382, 7
    %v1384 = vsub.s32 %v1381, %v1383
    %v1385 = vrot.slane %v1378, %v1384
    %v1386 = vcombine.low %v1326, %v1267
    %v1388 = vunpack.c.l.s4 1983009808
    %v1389 = vunpack.c.0.s8 %v1388
    %v1390 = vlaneseq
    %v1391 = vshrl.u32 %v1390, 7
    %v1392 = vsub.s32 %v1389, %v1391
    %v1393 = vrot.slane %v1386, %v1392
    %v1394 = vcombine.low %v1327, %v1269
    %v1396 = vunpack.c.l.s4 1983009808
    %v1397 = vunpack.c.0.s8 %v1396
    %v1398 = vlaneseq
    %v1399 = vshrl.u32 %v1398, 7
    %v1400 = vsub.s32 %v1397, %v1399
    %v1401 = vrot.slane %v1394, %v1400
    %v1402 = vcombine.low %v1328, %v1271
    %v1404 = vunpack.c.l.s4 1983009808
    %v1405 = vunpack.c.0.s8 %v1404
    %v1406 = vlaneseq
    %v1407 = vshrl.u32 %v1406, 7
    %v1408 = vsub.s32 %v1405, %v1407
    %v1409 = vrot.slane %v1402, %v1408
    %v1410 = vcombine.low %v1329, %v1273
    %v1412 = vunpack.c.l.s4 1983009808
    %v1413 = vunpack.c.0.s8 %v1412
    %v1414 = vlaneseq
    %v1415 = vshrl.u32 %v1414, 7
    %v1416 = vsub.s32 %v1413, %v1415
    %v1417 = vrot.slane %v1410, %v1416
    %v1418 = vcombine.low %v1330, %v1275
    %v1420 = vunpack.c.l.s4 1983009808
    %v1421 = vunpack.c.0.s8 %v1420
    %v1422 = vlaneseq
    %v1423 = vshrl.u32 %v1422, 7
    %v1424 = vsub.s32 %v1421, %v1423
    %v1425 = vrot.slane %v1418, %v1424
    %v1426 = vcombine.low %v1331, %v1277
    %v1428 = vunpack.c.l.s4 1983009808
    %v1429 = vunpack.c.0.s8 %v1428
    %v1430 = vlaneseq
    %v1431 = vshrl.u32 %v1430, 7
    %v1432 = vsub.s32 %v1429, %v1431
    %v1433 = vrot.slane %v1426, %v1432
    %v1434 = vcombine.low %v1332, %v1279
    %v1436 = vunpack.c.l.s4 1983009808
    %v1437 = vunpack.c.0.s8 %v1436
    %v1438 = vlaneseq
    %v1439 = vshrl.u32 %v1438, 7
    %v1440 = vsub.s32 %v1437, %v1439
    %v1441 = vrot.slane %v1434, %v1440
    %v1442 = vcombine.low %v1333, %v1281
    %v1444 = vunpack.c.l.s4 1983009808
    %v1445 = vunpack.c.0.s8 %v1444
    %v1446 = vlaneseq
    %v1447 = vshrl.u32 %v1446, 7
    %v1448 = vsub.s32 %v1445, %v1447
    %v1449 = vrot.slane %v1442, %v1448
    %v1450 = vcombine.low %v1334, %v1283
    %v1452 = vunpack.c.l.s4 1983009808
    %v1453 = vunpack.c.0.s8 %v1452
    %v1454 = vlaneseq
    %v1455 = vshrl.u32 %v1454, 7
    %v1456 = vsub.s32 %v1453, %v1455
    %v1457 = vrot.slane %v1450, %v1456
    %v1458 = vcombine.low %v1335, %v1285
    %v1460 = vunpack.c.l.s4 1983009808
    %v1461 = vunpack.c.0.s8 %v1460
    %v1462 = vlaneseq
    %v1463 = vshrl.u32 %v1462, 7
    %v1464 = vsub.s32 %v1461, %v1463
    %v1465 = vrot.slane %v1458, %v1464
    %v1466 = vcombine.low %v1336, %v1287
    %v1468 = vunpack.c.l.s4 1983009808
    %v1469 = vunpack.c.0.s8 %v1468
    %v1470 = vlaneseq
    %v1471 = vshrl.u32 %v1470, 7
    %v1472 = vsub.s32 %v1469, %v1471
    %v1473 = vrot.slane %v1466, %v1472
    %v1474 = vcombine.low %v1337, %v1289
    %v1476 = vunpack.c.l.s4 1983009808
    %v1477 = vunpack.c.0.s8 %v1476
    %v1478 = vlaneseq
    %v1479 = vshrl.u32 %v1478, 7
    %v1480 = vsub.s32 %v1477, %v1479
    %v1481 = vrot.slane %v1474, %v1480
    %v1482 = vld [vmem:[%s3] sm:$0xff]
    %v1483 = vld [vmem:[%s3 + $0x8] sm:$0xff]
    %v1484 = vld [vmem:[%s3 + $0x10] sm:$0xff]
    %v1485 = vld [vmem:[%s3 + $0x18] sm:$0xff]
    %v1486 = vld [vmem:[%s3 + $0x20] sm:$0xff]
    %v1487 = vld [vmem:[%s3 + $0x28] sm:$0xff]
    %v1488 = vld [vmem:[%s3 + $0x30] sm:$0xff]
    %v1489 = vld [vmem:[%s3 + $0x38] sm:$0xff]
    %v1490 = vld [vmem:[%s3 + $0x40] sm:$0xff]
    %v1491 = vld [vmem:[%s3 + $0x48] sm:$0xff]
    %v1492 = vld [vmem:[%s3 + $0x50] sm:$0xff]
    %v1493 = vld [vmem:[%s3 + $0x58] sm:$0xff]
    %v1494 = vld [vmem:[%s3 + $0x60] sm:$0xff]
    %v1495 = vld [vmem:[%s3 + $0x68] sm:$0xff]
    %v1496 = vld [vmem:[%s3 + $0x70] sm:$0xff]
    %v1497 = vld [vmem:[%s3 + $0x78] sm:$0xff]
    %v1498 = vld [vmem:[%s3 + $0x80] sm:$0xff]
    %v1499 = vld [vmem:[%s3 + $0x88] sm:$0xff]
    %v1500 = vld [vmem:[%s3 + $0x90] sm:$0xff]
    %v1501 = vld [vmem:[%s3 + $0x98] sm:$0xff]
    %v1502 = vld [vmem:[%s3 + $0xa0] sm:$0xff]
    %v1503 = vld [vmem:[%s3 + $0xa8] sm:$0xff]
    %v1504 = vld [vmem:[%s3 + $0xb0] sm:$0xf]
    %v1505 = vld [vmem:[%s4] sm:$0x1]
    %v1507 = vlaneseq
    %v1508 = vshrl.u32 %v1507, 7
    %v1509 = vsub.s32 0, %v1508
    %v1510 = vrot.slane %v1505, %v1509
    %v1512 = vcombine.low %v1361, %v1369
    %v1513 = vcombine.low %v1377, %v1385
    %v1515 = vunpack.c.l.s4 1983009808
    %v1516 = vunpack.c.0.s8 %v1515
    %v1517 = vlaneseq
    %v1518 = vshrl.u32 %v1517, 7
    %v1519 = vsub.s32 %v1516, %v1518
    %v1520 = vrot.slane %v1512, %v1519
    %v1522 = vunpack.c.l.s4 1983009808
    %v1523 = vunpack.c.0.s8 %v1522
    %v1524 = vlaneseq
    %v1525 = vshrl.u32 %v1524, 7
    %v1526 = vsub.s32 %v1523, %v1525
    %v1527 = vrot.slane %v1513, %v1526
    %v1528 = vcombine.low %v1520, %v1527
    %v1529 = vcombine.high %v1520, %v1527
    %v1530 = vcombine.low %v1393, %v1401
    %v1531 = vcombine.low %v1409, %v1417
    %v1533 = vunpack.c.l.s4 1983009808
    %v1534 = vunpack.c.0.s8 %v1533
    %v1535 = vlaneseq
    %v1536 = vshrl.u32 %v1535, 7
    %v1537 = vsub.s32 %v1534, %v1536
    %v1538 = vrot.slane %v1530, %v1537
    %v1540 = vunpack.c.l.s4 1983009808
    %v1541 = vunpack.c.0.s8 %v1540
    %v1542 = vlaneseq
    %v1543 = vshrl.u32 %v1542, 7
    %v1544 = vsub.s32 %v1541, %v1543
    %v1545 = vrot.slane %v1531, %v1544
    %v1546 = vcombine.low %v1538, %v1545
    %v1547 = vcombine.high %v1538, %v1545
    %v1548 = vcombine.low %v1425, %v1433
    %v1549 = vcombine.low %v1441, %v1449
    %v1551 = vunpack.c.l.s4 1983009808
    %v1552 = vunpack.c.0.s8 %v1551
    %v1553 = vlaneseq
    %v1554 = vshrl.u32 %v1553, 7
    %v1555 = vsub.s32 %v1552, %v1554
    %v1556 = vrot.slane %v1548, %v1555
    %v1558 = vunpack.c.l.s4 1983009808
    %v1559 = vunpack.c.0.s8 %v1558
    %v1560 = vlaneseq
    %v1561 = vshrl.u32 %v1560, 7
    %v1562 = vsub.s32 %v1559, %v1561
    %v1563 = vrot.slane %v1549, %v1562
    %v1564 = vcombine.low %v1556, %v1563
    %v1565 = vcombine.high %v1556, %v1563
    %v1566 = vcombine.low %v1457, %v1465
    %v1567 = vcombine.low %v1473, %v1481
    %v1569 = vunpack.c.l.s4 1983009808
    %v1570 = vunpack.c.0.s8 %v1569
    %v1571 = vlaneseq
    %v1572 = vshrl.u32 %v1571, 7
    %v1573 = vsub.s32 %v1570, %v1572
    %v1574 = vrot.slane %v1566, %v1573
    %v1576 = vunpack.c.l.s4 1983009808
    %v1577 = vunpack.c.0.s8 %v1576
    %v1578 = vlaneseq
    %v1579 = vshrl.u32 %v1578, 7
    %v1580 = vsub.s32 %v1577, %v1579
    %v1581 = vrot.slane %v1567, %v1580
    %v1582 = vcombine.low %v1574, %v1581
    %v1583 = vcombine.high %v1574, %v1581
    %v1588 = vsel %vm969, %v1529, 0
    %v1590 = vsel %vm969, %v1547, 0
    %v1592 = vsel %vm969, %v1565, 0
    %v1594 = vsel %vm969, %v1583, 0
    %v1597 = vsel %vm978, %v1504, 0
    %1599 = vmatprep.subr.mxu0 0.0
    %1600 = vmatpush1.msra.mxu0 %v1482
    %1601 = vmatprep.subr.mxu0 0.0
    %1602 = vmatpush1.msra.mxu0 %v1483
    %1603 = vmatprep.subr.mxu0 0.0
    %1604 = vmatpush1.msra.mxu0 %v1484
    %1605 = vmatprep.subr.mxu0 0.0
    %1606 = vmatpush1.msra.mxu0 %v1485
    %1607 = vmatprep.subr.mxu0 0.0
    %1608 = vmatpush1.msra.mxu0 %v1486
    %1609 = vmatprep.subr.mxu0 0.0
    %1610 = vmatpush1.msra.mxu0 %v1487
    %1611 = vmatprep.subr.mxu0 0.0
    %1612 = vmatpush1.msra.mxu0 %v1488
    %1613 = vmatprep.subr.mxu0 0.0
    %1614 = vmatpush1.msra.mxu0 %v1489
    %1615 = vmatprep.subr.mxu0 0.0
    %1616 = vmatpush1.msra.mxu0 %v1490
    %1617 = vmatprep.subr.mxu0 0.0
    %1618 = vmatpush1.msra.mxu0 %v1491
    %1619 = vmatprep.subr.mxu0 0.0
    %1620 = vmatpush1.msra.mxu0 %v1492
    %1621 = vmatprep.subr.mxu0 0.0
    %1622 = vmatpush1.msra.mxu0 %v1493
    %1623 = vmatprep.subr.mxu0 0.0
    %1624 = vmatpush1.msra.mxu0 %v1494
    %1625 = vmatprep.subr.mxu0 0.0
    %1626 = vmatpush1.msra.mxu0 %v1495
    %1627 = vmatprep.subr.mxu0 0.0
    %1628 = vmatpush1.msra.mxu0 %v1496
    %1629 = vmatprep.subr.mxu0 0.0
    %1630 = vmatpush1.msra.mxu0 %v1497
    %1631 = vmatprep.subr.mxu0 0.0
    %1632 = vmatpush1.msra.mxu0 %v1498
    %1633 = vmatprep.subr.mxu0 0.0
    %1634 = vmatpush1.msra.mxu0 %v1499
    %1635 = vmatprep.subr.mxu0 0.0
    %1636 = vmatpush1.msra.mxu0 %v1500
    %1637 = vmatprep.subr.mxu0 0.0
    %1638 = vmatpush1.msra.mxu0 %v1501
    %1639 = vmatprep.subr.mxu0 0.0
    %1640 = vmatpush1.msra.mxu0 %v1502
    %1641 = vmatprep.subr.mxu0 0.0
    %1642 = vmatpush1.msra.mxu0 %v1503
    %1643 = vmatprep.subr.mxu0 0.0
    %1644 = vmatpush1.msra.mxu0 %v1597
    %1645 = vmatprep.subr.mxu0 0.0
    %1646 = vmatpush1.msra.mxu0 0.0
    %1647 = vmatprep.subr.mxu0 0.0
    %1648 = vmatpush1.msra.mxu0 0.0
    %1649 = vmatprep.subr.mxu0 0.0
    %1650 = vmatpush1.msra.mxu0 0.0
    %1651 = vmatprep.subr.mxu0 0.0
    %1652 = vmatpush1.msra.mxu0 0.0
    %1653 = vmatprep.subr.mxu0 0.0
    %1654 = vmatpush1.msra.mxu0 0.0
    %1655 = vmatprep.subr.mxu0 0.0
    %1656 = vmatpush1.msra.mxu0 0.0
    %1657 = vmatprep.subr.mxu0 0.0
    %1658 = vmatpush1.msra.mxu0 0.0
    %1659 = vmatprep.subr.mxu0 0.0
    %1660 = vmatpush1.msra.mxu0 0.0
    %1661 = vmatprep.subr.mxu0 0.0
    %1662 = vmatpush1.msra.mxu0 0.0
    %1663 = vmatprep.mubr.f32.mxu0 %v1588
    %1664 = vmatmul.mubr.f32.gmra.mrb[0].mxu0 %v1528
    %v1665 = vpop.f32.mrb[0].mxu0
    %v1666 = vadd.f32 %v1510, %v1665
    %v1667 = vpop.f32.mrb[0].mxu0
    %1668 = vmatprep.mubr.f32.mxu0 %v1590
    %1669 = vmatmul.mubr.f32.gmra.mrb[0].mxu0 %v1546
    %v1670 = vpop.f32.mrb[0].mxu0
    %v1671 = vadd.f32 %v1510, %v1670
    %v1672 = vpop.f32.mrb[0].mxu0
    %1673 = vmatprep.mubr.f32.mxu0 %v1592
    %1674 = vmatmul.mubr.f32.gmra.mrb[0].mxu0 %v1564
    %v1675 = vpop.f32.mrb[0].mxu0
    %v1676 = vadd.f32 %v1510, %v1675
    %v1677 = vpop.f32.mrb[0].mxu0
    %1678 = vmatprep.mubr.f32.mxu0 %v1594
    %1679 = vmatmul.mubr.f32.gmra.mrb[0].mxu0 %v1582
    %v1680 = vpop.f32.mrb[0].mxu0
    %v1681 = vadd.f32 %v1510, %v1680
    %v1682 = vpop.f32.mrb[0].mxu0
    %1683 = vdwg.mxu0
    %v1684 = vmax.f32 %v1666, 0.0
    %v1685 = vmax.f32 %v1671, 0.0
    %v1686 = vmax.f32 %v1676, 0.0
    %v1687 = vmax.f32 %v1681, 0.0
    %v1692 = vcombine.high %v1684, %v1684
    %v1694 = vunpack.c.l.s4 1983009808
    %v1695 = vunpack.c.0.s8 %v1694
    %v1696 = vlaneseq
    %v1697 = vshrl.u32 %v1696, 7
    %v1698 = vsub.s32 %v1695, %v1697
    %v1699 = vrot.slane %v1684, %v1698
    %v1701 = vunpack.c.l.s4 1983009808
    %v1702 = vunpack.c.0.s8 %v1701
    %v1703 = vlaneseq
    %v1704 = vshrl.u32 %v1703, 7
    %v1705 = vsub.s32 %v1702, %v1704
    %v1706 = vrot.slane %v1692, %v1705
    %v1707 = vcombine.high %v1699, %v1699
    %v1708 = vcombine.high %v1706, %v1706
    %v1709 = vcombine.high %v1685, %v1685
    %v1711 = vunpack.c.l.s4 1983009808
    %v1712 = vunpack.c.0.s8 %v1711
    %v1713 = vlaneseq
    %v1714 = vshrl.u32 %v1713, 7
    %v1715 = vsub.s32 %v1712, %v1714
    %v1716 = vrot.slane %v1685, %v1715
    %v1718 = vunpack.c.l.s4 1983009808
    %v1719 = vunpack.c.0.s8 %v1718
    %v1720 = vlaneseq
    %v1721 = vshrl.u32 %v1720, 7
    %v1722 = vsub.s32 %v1719, %v1721
    %v1723 = vrot.slane %v1709, %v1722
    %v1724 = vcombine.high %v1716, %v1716
    %v1725 = vcombine.high %v1723, %v1723
    %v1726 = vcombine.high %v1686, %v1686
    %v1728 = vunpack.c.l.s4 1983009808
    %v1729 = vunpack.c.0.s8 %v1728
    %v1730 = vlaneseq
    %v1731 = vshrl.u32 %v1730, 7
    %v1732 = vsub.s32 %v1729, %v1731
    %v1733 = vrot.slane %v1686, %v1732
    %v1735 = vunpack.c.l.s4 1983009808
    %v1736 = vunpack.c.0.s8 %v1735
    %v1737 = vlaneseq
    %v1738 = vshrl.u32 %v1737, 7
    %v1739 = vsub.s32 %v1736, %v1738
    %v1740 = vrot.slane %v1726, %v1739
    %v1741 = vcombine.high %v1733, %v1733
    %v1742 = vcombine.high %v1740, %v1740
    %v1743 = vcombine.high %v1687, %v1687
    %v1745 = vunpack.c.l.s4 1983009808
    %v1746 = vunpack.c.0.s8 %v1745
    %v1747 = vlaneseq
    %v1748 = vshrl.u32 %v1747, 7
    %v1749 = vsub.s32 %v1746, %v1748
    %v1750 = vrot.slane %v1687, %v1749
    %v1752 = vunpack.c.l.s4 1983009808
    %v1753 = vunpack.c.0.s8 %v1752
    %v1754 = vlaneseq
    %v1755 = vshrl.u32 %v1754, 7
    %v1756 = vsub.s32 %v1753, %v1755
    %v1757 = vrot.slane %v1743, %v1756
    %v1758 = vcombine.high %v1750, %v1750
    %v1759 = vcombine.high %v1757, %v1757
    %1776 = vst.msk [vmem:[%s537] sm:$0x3] %vm430, %v1699
    %1777 = vst.msk [vmem:[%s537 + $0x2] sm:$0x3] %vm430, %v1707
    %1778 = vst.msk [vmem:[%s537 + $0x4] sm:$0x3] %vm430, %v1706
    %1779 = vst.msk [vmem:[%s537 + $0x6] sm:$0x3] %vm430, %v1708
    %1780 = vst.msk [vmem:[%s537 + $0x8] sm:$0x3] %vm430, %v1716
    %1781 = vst.msk [vmem:[%s537 + $0xa] sm:$0x3] %vm430, %v1724
    %1782 = vst.msk [vmem:[%s537 + $0xc] sm:$0x3] %vm430, %v1723
    %1783 = vst.msk [vmem:[%s537 + $0xe] sm:$0x3] %vm430, %v1725
    %1784 = vst.msk [vmem:[%s537 + $0x10] sm:$0x3] %vm430, %v1733
    %1785 = vst.msk [vmem:[%s537 + $0x12] sm:$0x3] %vm430, %v1741
    %1786 = vst.msk [vmem:[%s537 + $0x14] sm:$0x3] %vm430, %v1740
    %1787 = vst.msk [vmem:[%s537 + $0x16] sm:$0x3] %vm430, %v1742
    %1788 = vst.msk [vmem:[%s537 + $0x18] sm:$0x3] %vm430, %v1750
    %1789 = vst.msk [vmem:[%s537 + $0x1a] sm:$0x3] %vm430, %v1758
    %1790 = vst.msk [vmem:[%s537 + $0x1c] sm:$0x3] %vm430, %v1757
    %1791 = vst.msk [vmem:[%s537 + $0x1e] sm:$0x3] %vm430, %v1759
    %v1792 = vld [vmem:[#allocation3] sm:$0x3]
    %v1793 = vld [vmem:[#allocation3 + $0x2] sm:$0x3]
    %v1794 = vld [vmem:[#allocation3 + $0x4] sm:$0x3]
    %v1795 = vld [vmem:[#allocation3 + $0x6] sm:$0x3]
    %v1796 = vld [vmem:[#allocation3 + $0x8] sm:$0x3]
    %v1797 = vld [vmem:[#allocation3 + $0xa] sm:$0x3]
    %v1798 = vld [vmem:[#allocation3 + $0xc] sm:$0x3]
    %v1799 = vld [vmem:[#allocation3 + $0xe] sm:$0x3]
    %v1800 = vld [vmem:[#allocation3 + $0x10] sm:$0x3]
    %v1801 = vld [vmem:[#allocation3 + $0x12] sm:$0x3]
    %v1802 = vld [vmem:[#allocation3 + $0x14] sm:$0x3]
    %v1803 = vld [vmem:[#allocation3 + $0x16] sm:$0x3]
    %v1804 = vld [vmem:[#allocation3 + $0x18] sm:$0x3]
    %v1805 = vld [vmem:[#allocation3 + $0x1a] sm:$0x3]
    %v1806 = vld [vmem:[#allocation3 + $0x1c] sm:$0x3]
    %v1807 = vld [vmem:[#allocation3 + $0x1e] sm:$0x3]
    %v1808 = vld [vmem:[#allocation3 + $0x20] sm:$0x3]
    %v1809 = vld [vmem:[#allocation3 + $0x22] sm:$0x3]
    %1826 = vrot.lane.b32.xlu0 %v1793, 60
    %v1827 = vpop.permute.xlu0 %1826
    %1828 = vrot.lane.b32.xlu0 %v1794, 60
    %v1829 = vpop.permute.xlu0 %1828
    %1830 = vrot.lane.b32.xlu0 %v1795, 60
    %v1831 = vpop.permute.xlu0 %1830
    %1832 = vrot.lane.b32.xlu0 %v1796, 60
    %v1833 = vpop.permute.xlu0 %1832
    %1834 = vrot.lane.b32.xlu0 %v1797, 60
    %v1835 = vpop.permute.xlu0 %1834
    %1836 = vrot.lane.b32.xlu0 %v1798, 60
    %v1837 = vpop.permute.xlu0 %1836
    %1838 = vrot.lane.b32.xlu0 %v1799, 60
    %v1839 = vpop.permute.xlu0 %1838
    %1840 = vrot.lane.b32.xlu0 %v1800, 60
    %v1841 = vpop.permute.xlu0 %1840
    %1842 = vrot.lane.b32.xlu0 %v1801, 60
    %v1843 = vpop.permute.xlu0 %1842
    %1844 = vrot.lane.b32.xlu0 %v1802, 60
    %v1845 = vpop.permute.xlu0 %1844
    %1846 = vrot.lane.b32.xlu0 %v1803, 60
    %v1847 = vpop.permute.xlu0 %1846
    %1848 = vrot.lane.b32.xlu0 %v1804, 60
    %v1849 = vpop.permute.xlu0 %1848
    %1850 = vrot.lane.b32.xlu0 %v1805, 60
    %v1851 = vpop.permute.xlu0 %1850
    %1852 = vrot.lane.b32.xlu0 %v1806, 60
    %v1853 = vpop.permute.xlu0 %1852
    %1854 = vrot.lane.b32.xlu0 %v1807, 60
    %v1855 = vpop.permute.xlu0 %1854
    %1856 = vrot.lane.b32.xlu0 %v1808, 60
    %v1857 = vpop.permute.xlu0 %1856
    %1875 = vrot.lane.b32.xlu0 %v1794, 120
    %v1876 = vpop.permute.xlu0 %1875
    %1877 = vrot.lane.b32.xlu0 %v1795, 120
    %v1878 = vpop.permute.xlu0 %1877
    %1879 = vrot.lane.b32.xlu0 %v1796, 120
    %v1880 = vpop.permute.xlu0 %1879
    %1881 = vrot.lane.b32.xlu0 %v1797, 120
    %v1882 = vpop.permute.xlu0 %1881
    %1883 = vrot.lane.b32.xlu0 %v1798, 120
    %v1884 = vpop.permute.xlu0 %1883
    %1885 = vrot.lane.b32.xlu0 %v1799, 120
    %v1886 = vpop.permute.xlu0 %1885
    %1887 = vrot.lane.b32.xlu0 %v1800, 120
    %v1888 = vpop.permute.xlu0 %1887
    %1889 = vrot.lane.b32.xlu0 %v1801, 120
    %v1890 = vpop.permute.xlu0 %1889
    %1891 = vrot.lane.b32.xlu0 %v1802, 120
    %v1892 = vpop.permute.xlu0 %1891
    %1893 = vrot.lane.b32.xlu0 %v1803, 120
    %v1894 = vpop.permute.xlu0 %1893
    %1895 = vrot.lane.b32.xlu0 %v1804, 120
    %v1896 = vpop.permute.xlu0 %1895
    %1897 = vrot.lane.b32.xlu0 %v1805, 120
    %v1898 = vpop.permute.xlu0 %1897
    %1899 = vrot.lane.b32.xlu0 %v1806, 120
    %v1900 = vpop.permute.xlu0 %1899
    %1901 = vrot.lane.b32.xlu0 %v1807, 120
    %v1902 = vpop.permute.xlu0 %1901
    %1903 = vrot.lane.b32.xlu0 %v1808, 120
    %v1904 = vpop.permute.xlu0 %1903
    %1905 = vrot.lane.b32.xlu0 %v1809, 120
    %v1906 = vpop.permute.xlu0 %1905
    %v1923 = vsel %vm685, %v1792, %v1827
    %v1924 = vsel %vm685, %v1793, %v1829
    %v1925 = vsel %vm685, %v1794, %v1831
    %v1926 = vsel %vm685, %v1795, %v1833
    %v1927 = vsel %vm685, %v1796, %v1835
    %v1928 = vsel %vm685, %v1797, %v1837
    %v1929 = vsel %vm685, %v1798, %v1839
    %v1930 = vsel %vm685, %v1799, %v1841
    %v1931 = vsel %vm685, %v1800, %v1843
    %v1932 = vsel %vm685, %v1801, %v1845
    %v1933 = vsel %vm685, %v1802, %v1847
    %v1934 = vsel %vm685, %v1803, %v1849
    %v1935 = vsel %vm685, %v1804, %v1851
    %v1936 = vsel %vm685, %v1805, %v1853
    %v1937 = vsel %vm685, %v1806, %v1855
    %v1938 = vsel %vm685, %v1807, %v1857
    %v1939 = vsel %vm702, %v1923, %v1876
    %v1940 = vsel %vm702, %v1924, %v1878
    %v1941 = vsel %vm702, %v1925, %v1880
    %v1942 = vsel %vm702, %v1926, %v1882
    %v1943 = vsel %vm702, %v1927, %v1884
    %v1944 = vsel %vm702, %v1928, %v1886
    %v1945 = vsel %vm702, %v1929, %v1888
    %v1946 = vsel %vm702, %v1930, %v1890
    %v1947 = vsel %vm702, %v1931, %v1892
    %v1948 = vsel %vm702, %v1932, %v1894
    %v1949 = vsel %vm702, %v1933, %v1896
    %v1950 = vsel %vm702, %v1934, %v1898
    %v1951 = vsel %vm702, %v1935, %v1900
    %v1952 = vsel %vm702, %v1936, %v1902
    %v1953 = vsel %vm702, %v1937, %v1904
    %v1954 = vsel %vm702, %v1938, %v1906
    %v1971 = vcombine.low %v1939, %v1876
    %v1973 = vunpack.c.l.s4 1983009808
    %v1974 = vunpack.c.0.s8 %v1973
    %v1975 = vlaneseq
    %v1976 = vshrl.u32 %v1975, 7
    %v1977 = vsub.s32 %v1974, %v1976
    %v1978 = vrot.slane %v1971, %v1977
    %v1979 = vcombine.low %v1940, %v1878
    %v1981 = vunpack.c.l.s4 1983009808
    %v1982 = vunpack.c.0.s8 %v1981
    %v1983 = vlaneseq
    %v1984 = vshrl.u32 %v1983, 7
    %v1985 = vsub.s32 %v1982, %v1984
    %v1986 = vrot.slane %v1979, %v1985
    %v1987 = vcombine.low %v1941, %v1880
    %v1989 = vunpack.c.l.s4 1983009808
    %v1990 = vunpack.c.0.s8 %v1989
    %v1991 = vlaneseq
    %v1992 = vshrl.u32 %v1991, 7
    %v1993 = vsub.s32 %v1990, %v1992
    %v1994 = vrot.slane %v1987, %v1993
    %v1995 = vcombine.low %v1942, %v1882
    %v1997 = vunpack.c.l.s4 1983009808
    %v1998 = vunpack.c.0.s8 %v1997
    %v1999 = vlaneseq
    %v2000 = vshrl.u32 %v1999, 7
    %v2001 = vsub.s32 %v1998, %v2000
    %v2002 = vrot.slane %v1995, %v2001
    %v2003 = vcombine.low %v1943, %v1884
    %v2005 = vunpack.c.l.s4 1983009808
    %v2006 = vunpack.c.0.s8 %v2005
    %v2007 = vlaneseq
    %v2008 = vshrl.u32 %v2007, 7
    %v2009 = vsub.s32 %v2006, %v2008
    %v2010 = vrot.slane %v2003, %v2009
    %v2011 = vcombine.low %v1944, %v1886
    %v2013 = vunpack.c.l.s4 1983009808
    %v2014 = vunpack.c.0.s8 %v2013
    %v2015 = vlaneseq
    %v2016 = vshrl.u32 %v2015, 7
    %v2017 = vsub.s32 %v2014, %v2016
    %v2018 = vrot.slane %v2011, %v2017
    %v2019 = vcombine.low %v1945, %v1888
    %v2021 = vunpack.c.l.s4 1983009808
    %v2022 = vunpack.c.0.s8 %v2021
    %v2023 = vlaneseq
    %v2024 = vshrl.u32 %v2023, 7
    %v2025 = vsub.s32 %v2022, %v2024
    %v2026 = vrot.slane %v2019, %v2025
    %v2027 = vcombine.low %v1946, %v1890
    %v2029 = vunpack.c.l.s4 1983009808
    %v2030 = vunpack.c.0.s8 %v2029
    %v2031 = vlaneseq
    %v2032 = vshrl.u32 %v2031, 7
    %v2033 = vsub.s32 %v2030, %v2032
    %v2034 = vrot.slane %v2027, %v2033
    %v2035 = vcombine.low %v1947, %v1892
    %v2037 = vunpack.c.l.s4 1983009808
    %v2038 = vunpack.c.0.s8 %v2037
    %v2039 = vlaneseq
    %v2040 = vshrl.u32 %v2039, 7
    %v2041 = vsub.s32 %v2038, %v2040
    %v2042 = vrot.slane %v2035, %v2041
    %v2043 = vcombine.low %v1948, %v1894
    %v2045 = vunpack.c.l.s4 1983009808
    %v2046 = vunpack.c.0.s8 %v2045
    %v2047 = vlaneseq
    %v2048 = vshrl.u32 %v2047, 7
    %v2049 = vsub.s32 %v2046, %v2048
    %v2050 = vrot.slane %v2043, %v2049
    %v2051 = vcombine.low %v1949, %v1896
    %v2053 = vunpack.c.l.s4 1983009808
    %v2054 = vunpack.c.0.s8 %v2053
    %v2055 = vlaneseq
    %v2056 = vshrl.u32 %v2055, 7
    %v2057 = vsub.s32 %v2054, %v2056
    %v2058 = vrot.slane %v2051, %v2057
    %v2059 = vcombine.low %v1950, %v1898
    %v2061 = vunpack.c.l.s4 1983009808
    %v2062 = vunpack.c.0.s8 %v2061
    %v2063 = vlaneseq
    %v2064 = vshrl.u32 %v2063, 7
    %v2065 = vsub.s32 %v2062, %v2064
    %v2066 = vrot.slane %v2059, %v2065
    %v2067 = vcombine.low %v1951, %v1900
    %v2069 = vunpack.c.l.s4 1983009808
    %v2070 = vunpack.c.0.s8 %v2069
    %v2071 = vlaneseq
    %v2072 = vshrl.u32 %v2071, 7
    %v2073 = vsub.s32 %v2070, %v2072
    %v2074 = vrot.slane %v2067, %v2073
    %v2075 = vcombine.low %v1952, %v1902
    %v2077 = vunpack.c.l.s4 1983009808
    %v2078 = vunpack.c.0.s8 %v2077
    %v2079 = vlaneseq
    %v2080 = vshrl.u32 %v2079, 7
    %v2081 = vsub.s32 %v2078, %v2080
    %v2082 = vrot.slane %v2075, %v2081
    %v2083 = vcombine.low %v1953, %v1904
    %v2085 = vunpack.c.l.s4 1983009808
    %v2086 = vunpack.c.0.s8 %v2085
    %v2087 = vlaneseq
    %v2088 = vshrl.u32 %v2087, 7
    %v2089 = vsub.s32 %v2086, %v2088
    %v2090 = vrot.slane %v2083, %v2089
    %v2091 = vcombine.low %v1954, %v1906
    %v2093 = vunpack.c.l.s4 1983009808
    %v2094 = vunpack.c.0.s8 %v2093
    %v2095 = vlaneseq
    %v2096 = vshrl.u32 %v2095, 7
    %v2097 = vsub.s32 %v2094, %v2096
    %v2098 = vrot.slane %v2091, %v2097
    %v2099 = vld [vmem:[%s3] sm:$0xff]
    %v2100 = vld [vmem:[%s3 + $0x8] sm:$0xff]
    %v2101 = vld [vmem:[%s3 + $0x10] sm:$0xff]
    %v2102 = vld [vmem:[%s3 + $0x18] sm:$0xff]
    %v2103 = vld [vmem:[%s3 + $0x20] sm:$0xff]
    %v2104 = vld [vmem:[%s3 + $0x28] sm:$0xff]
    %v2105 = vld [vmem:[%s3 + $0x30] sm:$0xff]
    %v2106 = vld [vmem:[%s3 + $0x38] sm:$0xff]
    %v2107 = vld [vmem:[%s3 + $0x40] sm:$0xff]
    %v2108 = vld [vmem:[%s3 + $0x48] sm:$0xff]
    %v2109 = vld [vmem:[%s3 + $0x50] sm:$0xff]
    %v2110 = vld [vmem:[%s3 + $0x58] sm:$0xff]
    %v2111 = vld [vmem:[%s3 + $0x60] sm:$0xff]
    %v2112 = vld [vmem:[%s3 + $0x68] sm:$0xff]
    %v2113 = vld [vmem:[%s3 + $0x70] sm:$0xff]
    %v2114 = vld [vmem:[%s3 + $0x78] sm:$0xff]
    %v2115 = vld [vmem:[%s3 + $0x80] sm:$0xff]
    %v2116 = vld [vmem:[%s3 + $0x88] sm:$0xff]
    %v2117 = vld [vmem:[%s3 + $0x90] sm:$0xff]
    %v2118 = vld [vmem:[%s3 + $0x98] sm:$0xff]
    %v2119 = vld [vmem:[%s3 + $0xa0] sm:$0xff]
    %v2120 = vld [vmem:[%s3 + $0xa8] sm:$0xff]
    %v2121 = vld [vmem:[%s3 + $0xb0] sm:$0xf]
    %v2122 = vld [vmem:[%s4] sm:$0x1]
    %v2124 = vlaneseq
    %v2125 = vshrl.u32 %v2124, 7
    %v2126 = vsub.s32 0, %v2125
    %v2127 = vrot.slane %v2122, %v2126
    %v2129 = vcombine.low %v1978, %v1986
    %v2130 = vcombine.low %v1994, %v2002
    %v2132 = vunpack.c.l.s4 1983009808
    %v2133 = vunpack.c.0.s8 %v2132
    %v2134 = vlaneseq
    %v2135 = vshrl.u32 %v2134, 7
    %v2136 = vsub.s32 %v2133, %v2135
    %v2137 = vrot.slane %v2129, %v2136
    %v2139 = vunpack.c.l.s4 1983009808
    %v2140 = vunpack.c.0.s8 %v2139
    %v2141 = vlaneseq
    %v2142 = vshrl.u32 %v2141, 7
    %v2143 = vsub.s32 %v2140, %v2142
    %v2144 = vrot.slane %v2130, %v2143
    %v2145 = vcombine.low %v2137, %v2144
    %v2146 = vcombine.high %v2137, %v2144
    %v2147 = vcombine.low %v2010, %v2018
    %v2148 = vcombine.low %v2026, %v2034
    %v2150 = vunpack.c.l.s4 1983009808
    %v2151 = vunpack.c.0.s8 %v2150
    %v2152 = vlaneseq
    %v2153 = vshrl.u32 %v2152, 7
    %v2154 = vsub.s32 %v2151, %v2153
    %v2155 = vrot.slane %v2147, %v2154
    %v2157 = vunpack.c.l.s4 1983009808
    %v2158 = vunpack.c.0.s8 %v2157
    %v2159 = vlaneseq
    %v2160 = vshrl.u32 %v2159, 7
    %v2161 = vsub.s32 %v2158, %v2160
    %v2162 = vrot.slane %v2148, %v2161
    %v2163 = vcombine.low %v2155, %v2162
    %v2164 = vcombine.high %v2155, %v2162
    %v2165 = vcombine.low %v2042, %v2050
    %v2166 = vcombine.low %v2058, %v2066
    %v2168 = vunpack.c.l.s4 1983009808
    %v2169 = vunpack.c.0.s8 %v2168
    %v2170 = vlaneseq
    %v2171 = vshrl.u32 %v2170, 7
    %v2172 = vsub.s32 %v2169, %v2171
    %v2173 = vrot.slane %v2165, %v2172
    %v2175 = vunpack.c.l.s4 1983009808
    %v2176 = vunpack.c.0.s8 %v2175
    %v2177 = vlaneseq
    %v2178 = vshrl.u32 %v2177, 7
    %v2179 = vsub.s32 %v2176, %v2178
    %v2180 = vrot.slane %v2166, %v2179
    %v2181 = vcombine.low %v2173, %v2180
    %v2182 = vcombine.high %v2173, %v2180
    %v2183 = vcombine.low %v2074, %v2082
    %v2184 = vcombine.low %v2090, %v2098
    %v2186 = vunpack.c.l.s4 1983009808
    %v2187 = vunpack.c.0.s8 %v2186
    %v2188 = vlaneseq
    %v2189 = vshrl.u32 %v2188, 7
    %v2190 = vsub.s32 %v2187, %v2189
    %v2191 = vrot.slane %v2183, %v2190
    %v2193 = vunpack.c.l.s4 1983009808
    %v2194 = vunpack.c.0.s8 %v2193
    %v2195 = vlaneseq
    %v2196 = vshrl.u32 %v2195, 7
    %v2197 = vsub.s32 %v2194, %v2196
    %v2198 = vrot.slane %v2184, %v2197
    %v2199 = vcombine.low %v2191, %v2198
    %v2200 = vcombine.high %v2191, %v2198
    %v2205 = vsel %vm969, %v2146, 0
    %v2207 = vsel %vm969, %v2164, 0
    %v2209 = vsel %vm969, %v2182, 0
    %v2211 = vsel %vm969, %v2200, 0
    %v2214 = vsel %vm978, %v2121, 0
    %2216 = vmatprep.subr.mxu0 0.0
    %2217 = vmatpush1.msra.mxu0 %v2099
    %2218 = vmatprep.subr.mxu0 0.0
    %2219 = vmatpush1.msra.mxu0 %v2100
    %2220 = vmatprep.subr.mxu0 0.0
    %2221 = vmatpush1.msra.mxu0 %v2101
    %2222 = vmatprep.subr.mxu0 0.0
    %2223 = vmatpush1.msra.mxu0 %v2102
    %2224 = vmatprep.subr.mxu0 0.0
    %2225 = vmatpush1.msra.mxu0 %v2103
    %2226 = vmatprep.subr.mxu0 0.0
    %2227 = vmatpush1.msra.mxu0 %v2104
    %2228 = vmatprep.subr.mxu0 0.0
    %2229 = vmatpush1.msra.mxu0 %v2105
    %2230 = vmatprep.subr.mxu0 0.0
    %2231 = vmatpush1.msra.mxu0 %v2106
    %2232 = vmatprep.subr.mxu0 0.0
    %2233 = vmatpush1.msra.mxu0 %v2107
    %2234 = vmatprep.subr.mxu0 0.0
    %2235 = vmatpush1.msra.mxu0 %v2108
    %2236 = vmatprep.subr.mxu0 0.0
    %2237 = vmatpush1.msra.mxu0 %v2109
    %2238 = vmatprep.subr.mxu0 0.0
    %2239 = vmatpush1.msra.mxu0 %v2110
    %2240 = vmatprep.subr.mxu0 0.0
    %2241 = vmatpush1.msra.mxu0 %v2111
    %2242 = vmatprep.subr.mxu0 0.0
    %2243 = vmatpush1.msra.mxu0 %v2112
    %2244 = vmatprep.subr.mxu0 0.0
    %2245 = vmatpush1.msra.mxu0 %v2113
    %2246 = vmatprep.subr.mxu0 0.0
    %2247 = vmatpush1.msra.mxu0 %v2114
    %2248 = vmatprep.subr.mxu0 0.0
    %2249 = vmatpush1.msra.mxu0 %v2115
    %2250 = vmatprep.subr.mxu0 0.0
    %2251 = vmatpush1.msra.mxu0 %v2116
    %2252 = vmatprep.subr.mxu0 0.0
    %2253 = vmatpush1.msra.mxu0 %v2117
    %2254 = vmatprep.subr.mxu0 0.0
    %2255 = vmatpush1.msra.mxu0 %v2118
    %2256 = vmatprep.subr.mxu0 0.0
    %2257 = vmatpush1.msra.mxu0 %v2119
    %2258 = vmatprep.subr.mxu0 0.0
    %2259 = vmatpush1.msra.mxu0 %v2120
    %2260 = vmatprep.subr.mxu0 0.0
    %2261 = vmatpush1.msra.mxu0 %v2214
    %2262 = vmatprep.subr.mxu0 0.0
    %2263 = vmatpush1.msra.mxu0 0.0
    %2264 = vmatprep.subr.mxu0 0.0
    %2265 = vmatpush1.msra.mxu0 0.0
    %2266 = vmatprep.subr.mxu0 0.0
    %2267 = vmatpush1.msra.mxu0 0.0
    %2268 = vmatprep.subr.mxu0 0.0
    %2269 = vmatpush1.msra.mxu0 0.0
    %2270 = vmatprep.subr.mxu0 0.0
    %2271 = vmatpush1.msra.mxu0 0.0
    %2272 = vmatprep.subr.mxu0 0.0
    %2273 = vmatpush1.msra.mxu0 0.0
    %2274 = vmatprep.subr.mxu0 0.0
    %2275 = vmatpush1.msra.mxu0 0.0
    %2276 = vmatprep.subr.mxu0 0.0
    %2277 = vmatpush1.msra.mxu0 0.0
    %2278 = vmatprep.subr.mxu0 0.0
    %2279 = vmatpush1.msra.mxu0 0.0
    %2280 = vmatprep.mubr.f32.mxu0 %v2205
    %2281 = vmatmul.mubr.f32.gmra.mrb[0].mxu0 %v2145
    %v2282 = vpop.f32.mrb[0].mxu0
    %v2283 = vadd.f32 %v2127, %v2282
    %v2284 = vpop.f32.mrb[0].mxu0
    %2285 = vmatprep.mubr.f32.mxu0 %v2207
    %2286 = vmatmul.mubr.f32.gmra.mrb[0].mxu0 %v2163
    %v2287 = vpop.f32.mrb[0].mxu0
    %v2288 = vadd.f32 %v2127, %v2287
    %v2289 = vpop.f32.mrb[0].mxu0
    %2290 = vmatprep.mubr.f32.mxu0 %v2209
    %2291 = vmatmul.mubr.f32.gmra.mrb[0].mxu0 %v2181
    %v2292 = vpop.f32.mrb[0].mxu0
    %v2293 = vadd.f32 %v2127, %v2292
    %v2294 = vpop.f32.mrb[0].mxu0
    %2295 = vmatprep.mubr.f32.mxu0 %v2211
    %2296 = vmatmul.mubr.f32.gmra.mrb[0].mxu0 %v2199
    %v2297 = vpop.f32.mrb[0].mxu0
    %v2298 = vadd.f32 %v2127, %v2297
    %v2299 = vpop.f32.mrb[0].mxu0
    %2300 = vdwg.mxu0
    %v2301 = vmax.f32 %v2283, 0.0
    %v2302 = vmax.f32 %v2288, 0.0
    %v2303 = vmax.f32 %v2293, 0.0
    %v2304 = vmax.f32 %v2298, 0.0
    %v2309 = vcombine.high %v2301, %v2301
    %v2311 = vunpack.c.l.s4 1983009808
    %v2312 = vunpack.c.0.s8 %v2311
    %v2313 = vlaneseq
    %v2314 = vshrl.u32 %v2313, 7
    %v2315 = vsub.s32 %v2312, %v2314
    %v2316 = vrot.slane %v2301, %v2315
    %v2318 = vunpack.c.l.s4 1983009808
    %v2319 = vunpack.c.0.s8 %v2318
    %v2320 = vlaneseq
    %v2321 = vshrl.u32 %v2320, 7
    %v2322 = vsub.s32 %v2319, %v2321
    %v2323 = vrot.slane %v2309, %v2322
    %v2324 = vcombine.high %v2316, %v2316
    %v2325 = vcombine.high %v2323, %v2323
    %v2326 = vcombine.high %v2302, %v2302
    %v2328 = vunpack.c.l.s4 1983009808
    %v2329 = vunpack.c.0.s8 %v2328
    %v2330 = vlaneseq
    %v2331 = vshrl.u32 %v2330, 7
    %v2332 = vsub.s32 %v2329, %v2331
    %v2333 = vrot.slane %v2302, %v2332
    %v2335 = vunpack.c.l.s4 1983009808
    %v2336 = vunpack.c.0.s8 %v2335
    %v2337 = vlaneseq
    %v2338 = vshrl.u32 %v2337, 7
    %v2339 = vsub.s32 %v2336, %v2338
    %v2340 = vrot.slane %v2326, %v2339
    %v2341 = vcombine.high %v2333, %v2333
    %v2342 = vcombine.high %v2340, %v2340
    %v2343 = vcombine.high %v2303, %v2303
    %v2345 = vunpack.c.l.s4 1983009808
    %v2346 = vunpack.c.0.s8 %v2345
    %v2347 = vlaneseq
    %v2348 = vshrl.u32 %v2347, 7
    %v2349 = vsub.s32 %v2346, %v2348
    %v2350 = vrot.slane %v2303, %v2349
    %v2352 = vunpack.c.l.s4 1983009808
    %v2353 = vunpack.c.0.s8 %v2352
    %v2354 = vlaneseq
    %v2355 = vshrl.u32 %v2354, 7
    %v2356 = vsub.s32 %v2353, %v2355
    %v2357 = vrot.slane %v2343, %v2356
    %v2358 = vcombine.high %v2350, %v2350
    %v2359 = vcombine.high %v2357, %v2357
    %v2360 = vcombine.high %v2304, %v2304
    %v2362 = vunpack.c.l.s4 1983009808
    %v2363 = vunpack.c.0.s8 %v2362
    %v2364 = vlaneseq
    %v2365 = vshrl.u32 %v2364, 7
    %v2366 = vsub.s32 %v2363, %v2365
    %v2367 = vrot.slane %v2304, %v2366
    %v2369 = vunpack.c.l.s4 1983009808
    %v2370 = vunpack.c.0.s8 %v2369
    %v2371 = vlaneseq
    %v2372 = vshrl.u32 %v2371, 7
    %v2373 = vsub.s32 %v2370, %v2372
    %v2374 = vrot.slane %v2360, %v2373
    %v2375 = vcombine.high %v2367, %v2367
    %v2376 = vcombine.high %v2374, %v2374
    %2393 = vst.msk [vmem:[%s537] sm:$0x3] %vm430, %v2316
    %2394 = vst.msk [vmem:[%s537 + $0x2] sm:$0x3] %vm430, %v2324
    %2395 = vst.msk [vmem:[%s537 + $0x4] sm:$0x3] %vm430, %v2323
    %2396 = vst.msk [vmem:[%s537 + $0x6] sm:$0x3] %vm430, %v2325
    %2397 = vst.msk [vmem:[%s537 + $0x8] sm:$0x3] %vm430, %v2333
    %2398 = vst.msk [vmem:[%s537 + $0xa] sm:$0x3] %vm430, %v2341
    %2399 = vst.msk [vmem:[%s537 + $0xc] sm:$0x3] %vm430, %v2340
    %2400 = vst.msk [vmem:[%s537 + $0xe] sm:$0x3] %vm430, %v2342
    %2401 = vst.msk [vmem:[%s537 + $0x10] sm:$0x3] %vm430, %v2350
    %2402 = vst.msk [vmem:[%s537 + $0x12] sm:$0x3] %vm430, %v2358
    %2403 = vst.msk [vmem:[%s537 + $0x14] sm:$0x3] %vm430, %v2357
    %2404 = vst.msk [vmem:[%s537 + $0x16] sm:$0x3] %vm430, %v2359
    %2405 = vst.msk [vmem:[%s537 + $0x18] sm:$0x3] %vm430, %v2367
    %2406 = vst.msk [vmem:[%s537 + $0x1a] sm:$0x3] %vm430, %v2375
    %2407 = vst.msk [vmem:[%s537 + $0x1c] sm:$0x3] %vm430, %v2374
    %2408 = vst.msk [vmem:[%s537 + $0x1e] sm:$0x3] %vm430, %v2376
    %v2409 = vld [vmem:[#allocation3] sm:$0x3]
    %v2410 = vld [vmem:[#allocation3 + $0x2] sm:$0x3]
    %v2411 = vld [vmem:[#allocation3 + $0x4] sm:$0x3]
    %v2412 = vld [vmem:[#allocation3 + $0x6] sm:$0x3]
    %v2413 = vld [vmem:[#allocation3 + $0x8] sm:$0x3]
    %v2414 = vld [vmem:[#allocation3 + $0xa] sm:$0x3]
    %v2415 = vld [vmem:[#allocation3 + $0xc] sm:$0x3]
    %v2416 = vld [vmem:[#allocation3 + $0xe] sm:$0x3]
    %v2417 = vld [vmem:[#allocation3 + $0x10] sm:$0x3]
    %v2418 = vld [vmem:[#allocation3 + $0x12] sm:$0x3]
    %v2419 = vld [vmem:[#allocation3 + $0x14] sm:$0x3]
    %v2420 = vld [vmem:[#allocation3 + $0x16] sm:$0x3]
    %v2421 = vld [vmem:[#allocation3 + $0x18] sm:$0x3]
    %v2422 = vld [vmem:[#allocation3 + $0x1a] sm:$0x3]
    %v2423 = vld [vmem:[#allocation3 + $0x1c] sm:$0x3]
    %v2424 = vld [vmem:[#allocation3 + $0x1e] sm:$0x3]
    %v2425 = vld [vmem:[#allocation3 + $0x20] sm:$0x3]
    %v2426 = vld [vmem:[#allocation3 + $0x22] sm:$0x3]
    %2443 = vrot.lane.b32.xlu0 %v2410, 60
    %v2444 = vpop.permute.xlu0 %2443
    %2445 = vrot.lane.b32.xlu0 %v2411, 60
    %v2446 = vpop.permute.xlu0 %2445
    %2447 = vrot.lane.b32.xlu0 %v2412, 60
    %v2448 = vpop.permute.xlu0 %2447
    %2449 = vrot.lane.b32.xlu0 %v2413, 60
    %v2450 = vpop.permute.xlu0 %2449
    %2451 = vrot.lane.b32.xlu0 %v2414, 60
    %v2452 = vpop.permute.xlu0 %2451
    %2453 = vrot.lane.b32.xlu0 %v2415, 60
    %v2454 = vpop.permute.xlu0 %2453
    %2455 = vrot.lane.b32.xlu0 %v2416, 60
    %v2456 = vpop.permute.xlu0 %2455
    %2457 = vrot.lane.b32.xlu0 %v2417, 60
    %v2458 = vpop.permute.xlu0 %2457
    %2459 = vrot.lane.b32.xlu0 %v2418, 60
    %v2460 = vpop.permute.xlu0 %2459
    %2461 = vrot.lane.b32.xlu0 %v2419, 60
    %v2462 = vpop.permute.xlu0 %2461
    %2463 = vrot.lane.b32.xlu0 %v2420, 60
    %v2464 = vpop.permute.xlu0 %2463
    %2465 = vrot.lane.b32.xlu0 %v2421, 60
    %v2466 = vpop.permute.xlu0 %2465
    %2467 = vrot.lane.b32.xlu0 %v2422, 60
    %v2468 = vpop.permute.xlu0 %2467
    %2469 = vrot.lane.b32.xlu0 %v2423, 60
    %v2470 = vpop.permute.xlu0 %2469
    %2471 = vrot.lane.b32.xlu0 %v2424, 60
    %v2472 = vpop.permute.xlu0 %2471
    %2473 = vrot.lane.b32.xlu0 %v2425, 60
    %v2474 = vpop.permute.xlu0 %2473
    %2492 = vrot.lane.b32.xlu0 %v2411, 120
    %v2493 = vpop.permute.xlu0 %2492
    %2494 = vrot.lane.b32.xlu0 %v2412, 120
    %v2495 = vpop.permute.xlu0 %2494
    %2496 = vrot.lane.b32.xlu0 %v2413, 120
    %v2497 = vpop.permute.xlu0 %2496
    %2498 = vrot.lane.b32.xlu0 %v2414, 120
    %v2499 = vpop.permute.xlu0 %2498
    %2500 = vrot.lane.b32.xlu0 %v2415, 120
    %v2501 = vpop.permute.xlu0 %2500
    %2502 = vrot.lane.b32.xlu0 %v2416, 120
    %v2503 = vpop.permute.xlu0 %2502
    %2504 = vrot.lane.b32.xlu0 %v2417, 120
    %v2505 = vpop.permute.xlu0 %2504
    %2506 = vrot.lane.b32.xlu0 %v2418, 120
    %v2507 = vpop.permute.xlu0 %2506
    %2508 = vrot.lane.b32.xlu0 %v2419, 120
    %v2509 = vpop.permute.xlu0 %2508
    %2510 = vrot.lane.b32.xlu0 %v2420, 120
    %v2511 = vpop.permute.xlu0 %2510
    %2512 = vrot.lane.b32.xlu0 %v2421, 120
    %v2513 = vpop.permute.xlu0 %2512
    %2514 = vrot.lane.b32.xlu0 %v2422, 120
    %v2515 = vpop.permute.xlu0 %2514
    %2516 = vrot.lane.b32.xlu0 %v2423, 120
    %v2517 = vpop.permute.xlu0 %2516
    %2518 = vrot.lane.b32.xlu0 %v2424, 120
    %v2519 = vpop.permute.xlu0 %2518
    %2520 = vrot.lane.b32.xlu0 %v2425, 120
    %v2521 = vpop.permute.xlu0 %2520
    %2522 = vrot.lane.b32.xlu0 %v2426, 120
    %v2523 = vpop.permute.xlu0 %2522
    %v2540 = vsel %vm685, %v2409, %v2444
    %v2541 = vsel %vm685, %v2410, %v2446
    %v2542 = vsel %vm685, %v2411, %v2448
    %v2543 = vsel %vm685, %v2412, %v2450
    %v2544 = vsel %vm685, %v2413, %v2452
    %v2545 = vsel %vm685, %v2414, %v2454
    %v2546 = vsel %vm685, %v2415, %v2456
    %v2547 = vsel %vm685, %v2416, %v2458
    %v2548 = vsel %vm685, %v2417, %v2460
    %v2549 = vsel %vm685, %v2418, %v2462
    %v2550 = vsel %vm685, %v2419, %v2464
    %v2551 = vsel %vm685, %v2420, %v2466
    %v2552 = vsel %vm685, %v2421, %v2468
    %v2553 = vsel %vm685, %v2422, %v2470
    %v2554 = vsel %vm685, %v2423, %v2472
    %v2555 = vsel %vm685, %v2424, %v2474
    %v2556 = vsel %vm702, %v2540, %v2493
    %v2557 = vsel %vm702, %v2541, %v2495
    %v2558 = vsel %vm702, %v2542, %v2497
    %v2559 = vsel %vm702, %v2543, %v2499
    %v2560 = vsel %vm702, %v2544, %v2501
    %v2561 = vsel %vm702, %v2545, %v2503
    %v2562 = vsel %vm702, %v2546, %v2505
    %v2563 = vsel %vm702, %v2547, %v2507
    %v2564 = vsel %vm702, %v2548, %v2509
    %v2565 = vsel %vm702, %v2549, %v2511
    %v2566 = vsel %vm702, %v2550, %v2513
    %v2567 = vsel %vm702, %v2551, %v2515
    %v2568 = vsel %vm702, %v2552, %v2517
    %v2569 = vsel %vm702, %v2553, %v2519
    %v2570 = vsel %vm702, %v2554, %v2521
    %v2571 = vsel %vm702, %v2555, %v2523
    %v2588 = vcombine.low %v2556, %v2493
    %v2590 = vunpack.c.l.s4 1983009808
    %v2591 = vunpack.c.0.s8 %v2590
    %v2592 = vlaneseq
    %v2593 = vshrl.u32 %v2592, 7
    %v2594 = vsub.s32 %v2591, %v2593
    %v2595 = vrot.slane %v2588, %v2594
    %v2596 = vcombine.low %v2557, %v2495
    %v2598 = vunpack.c.l.s4 1983009808
    %v2599 = vunpack.c.0.s8 %v2598
    %v2600 = vlaneseq
    %v2601 = vshrl.u32 %v2600, 7
    %v2602 = vsub.s32 %v2599, %v2601
    %v2603 = vrot.slane %v2596, %v2602
    %v2604 = vcombine.low %v2558, %v2497
    %v2606 = vunpack.c.l.s4 1983009808
    %v2607 = vunpack.c.0.s8 %v2606
    %v2608 = vlaneseq
    %v2609 = vshrl.u32 %v2608, 7
    %v2610 = vsub.s32 %v2607, %v2609
    %v2611 = vrot.slane %v2604, %v2610
    %v2612 = vcombine.low %v2559, %v2499
    %v2614 = vunpack.c.l.s4 1983009808
    %v2615 = vunpack.c.0.s8 %v2614
    %v2616 = vlaneseq
    %v2617 = vshrl.u32 %v2616, 7
    %v2618 = vsub.s32 %v2615, %v2617
    %v2619 = vrot.slane %v2612, %v2618
    %v2620 = vcombine.low %v2560, %v2501
    %v2622 = vunpack.c.l.s4 1983009808
    %v2623 = vunpack.c.0.s8 %v2622
    %v2624 = vlaneseq
    %v2625 = vshrl.u32 %v2624, 7
    %v2626 = vsub.s32 %v2623, %v2625
    %v2627 = vrot.slane %v2620, %v2626
    %v2628 = vcombine.low %v2561, %v2503
    %v2630 = vunpack.c.l.s4 1983009808
    %v2631 = vunpack.c.0.s8 %v2630
    %v2632 = vlaneseq
    %v2633 = vshrl.u32 %v2632, 7
    %v2634 = vsub.s32 %v2631, %v2633
    %v2635 = vrot.slane %v2628, %v2634
    %v2636 = vcombine.low %v2562, %v2505
    %v2638 = vunpack.c.l.s4 1983009808
    %v2639 = vunpack.c.0.s8 %v2638
    %v2640 = vlaneseq
    %v2641 = vshrl.u32 %v2640, 7
    %v2642 = vsub.s32 %v2639, %v2641
    %v2643 = vrot.slane %v2636, %v2642
    %v2644 = vcombine.low %v2563, %v2507
    %v2646 = vunpack.c.l.s4 1983009808
    %v2647 = vunpack.c.0.s8 %v2646
    %v2648 = vlaneseq
    %v2649 = vshrl.u32 %v2648, 7
    %v2650 = vsub.s32 %v2647, %v2649
    %v2651 = vrot.slane %v2644, %v2650
    %v2652 = vcombine.low %v2564, %v2509
    %v2654 = vunpack.c.l.s4 1983009808
    %v2655 = vunpack.c.0.s8 %v2654
    %v2656 = vlaneseq
    %v2657 = vshrl.u32 %v2656, 7
    %v2658 = vsub.s32 %v2655, %v2657
    %v2659 = vrot.slane %v2652, %v2658
    %v2660 = vcombine.low %v2565, %v2511
    %v2662 = vunpack.c.l.s4 1983009808
    %v2663 = vunpack.c.0.s8 %v2662
    %v2664 = vlaneseq
    %v2665 = vshrl.u32 %v2664, 7
    %v2666 = vsub.s32 %v2663, %v2665
    %v2667 = vrot.slane %v2660, %v2666
    %v2668 = vcombine.low %v2566, %v2513
    %v2670 = vunpack.c.l.s4 1983009808
    %v2671 = vunpack.c.0.s8 %v2670
    %v2672 = vlaneseq
    %v2673 = vshrl.u32 %v2672, 7
    %v2674 = vsub.s32 %v2671, %v2673
    %v2675 = vrot.slane %v2668, %v2674
    %v2676 = vcombine.low %v2567, %v2515
    %v2678 = vunpack.c.l.s4 1983009808
    %v2679 = vunpack.c.0.s8 %v2678
    %v2680 = vlaneseq
    %v2681 = vshrl.u32 %v2680, 7
    %v2682 = vsub.s32 %v2679, %v2681
    %v2683 = vrot.slane %v2676, %v2682
    %v2684 = vcombine.low %v2568, %v2517
    %v2686 = vunpack.c.l.s4 1983009808
    %v2687 = vunpack.c.0.s8 %v2686
    %v2688 = vlaneseq
    %v2689 = vshrl.u32 %v2688, 7
    %v2690 = vsub.s32 %v2687, %v2689
    %v2691 = vrot.slane %v2684, %v2690
    %v2692 = vcombine.low %v2569, %v2519
    %v2694 = vunpack.c.l.s4 1983009808
    %v2695 = vunpack.c.0.s8 %v2694
    %v2696 = vlaneseq
    %v2697 = vshrl.u32 %v2696, 7
    %v2698 = vsub.s32 %v2695, %v2697
    %v2699 = vrot.slane %v2692, %v2698
    %v2700 = vcombine.low %v2570, %v2521
    %v2702 = vunpack.c.l.s4 1983009808
    %v2703 = vunpack.c.0.s8 %v2702
    %v2704 = vlaneseq
    %v2705 = vshrl.u32 %v2704, 7
    %v2706 = vsub.s32 %v2703, %v2705
    %v2707 = vrot.slane %v2700, %v2706
    %v2708 = vcombine.low %v2571, %v2523
    %v2710 = vunpack.c.l.s4 1983009808
    %v2711 = vunpack.c.0.s8 %v2710
    %v2712 = vlaneseq
    %v2713 = vshrl.u32 %v2712, 7
    %v2714 = vsub.s32 %v2711, %v2713
    %v2715 = vrot.slane %v2708, %v2714
    %v2716 = vld [vmem:[%s3] sm:$0xff]
    %v2717 = vld [vmem:[%s3 + $0x8] sm:$0xff]
    %v2718 = vld [vmem:[%s3 + $0x10] sm:$0xff]
    %v2719 = vld [vmem:[%s3 + $0x18] sm:$0xff]
    %v2720 = vld [vmem:[%s3 + $0x20] sm:$0xff]
    %v2721 = vld [vmem:[%s3 + $0x28] sm:$0xff]
    %v2722 = vld [vmem:[%s3 + $0x30] sm:$0xff]
    %v2723 = vld [vmem:[%s3 + $0x38] sm:$0xff]
    %v2724 = vld [vmem:[%s3 + $0x40] sm:$0xff]
    %v2725 = vld [vmem:[%s3 + $0x48] sm:$0xff]
    %v2726 = vld [vmem:[%s3 + $0x50] sm:$0xff]
    %v2727 = vld [vmem:[%s3 + $0x58] sm:$0xff]
    %v2728 = vld [vmem:[%s3 + $0x60] sm:$0xff]
    %v2729 = vld [vmem:[%s3 + $0x68] sm:$0xff]
    %v2730 = vld [vmem:[%s3 + $0x70] sm:$0xff]
    %v2731 = vld [vmem:[%s3 + $0x78] sm:$0xff]
    %v2732 = vld [vmem:[%s3 + $0x80] sm:$0xff]
    %v2733 = vld [vmem:[%s3 + $0x88] sm:$0xff]
    %v2734 = vld [vmem:[%s3 + $0x90] sm:$0xff]
    %v2735 = vld [vmem:[%s3 + $0x98] sm:$0xff]
    %v2736 = vld [vmem:[%s3 + $0xa0] sm:$0xff]
    %v2737 = vld [vmem:[%s3 + $0xa8] sm:$0xff]
    %v2738 = vld [vmem:[%s3 + $0xb0] sm:$0xf]
    %v2739 = vld [vmem:[%s4] sm:$0x1]
    %v2741 = vlaneseq
    %v2742 = vshrl.u32 %v2741, 7
    %v2743 = vsub.s32 0, %v2742
    %v2744 = vrot.slane %v2739, %v2743
    %v2746 = vcombine.low %v2595, %v2603
    %v2747 = vcombine.low %v2611, %v2619
    %v2749 = vunpack.c.l.s4 1983009808
    %v2750 = vunpack.c.0.s8 %v2749
    %v2751 = vlaneseq
    %v2752 = vshrl.u32 %v2751, 7
    %v2753 = vsub.s32 %v2750, %v2752
    %v2754 = vrot.slane %v2746, %v2753
    %v2756 = vunpack.c.l.s4 1983009808
    %v2757 = vunpack.c.0.s8 %v2756
    %v2758 = vlaneseq
    %v2759 = vshrl.u32 %v2758, 7
    %v2760 = vsub.s32 %v2757, %v2759
    %v2761 = vrot.slane %v2747, %v2760
    %v2762 = vcombine.low %v2754, %v2761
    %v2763 = vcombine.high %v2754, %v2761
    %v2764 = vcombine.low %v2627, %v2635
    %v2765 = vcombine.low %v2643, %v2651
    %v2767 = vunpack.c.l.s4 1983009808
    %v2768 = vunpack.c.0.s8 %v2767
    %v2769 = vlaneseq
    %v2770 = vshrl.u32 %v2769, 7
    %v2771 = vsub.s32 %v2768, %v2770
    %v2772 = vrot.slane %v2764, %v2771
    %v2774 = vunpack.c.l.s4 1983009808
    %v2775 = vunpack.c.0.s8 %v2774
    %v2776 = vlaneseq
    %v2777 = vshrl.u32 %v2776, 7
    %v2778 = vsub.s32 %v2775, %v2777
    %v2779 = vrot.slane %v2765, %v2778
    %v2780 = vcombine.low %v2772, %v2779
    %v2781 = vcombine.high %v2772, %v2779
    %v2782 = vcombine.low %v2659, %v2667
    %v2783 = vcombine.low %v2675, %v2683
    %v2785 = vunpack.c.l.s4 1983009808
    %v2786 = vunpack.c.0.s8 %v2785
    %v2787 = vlaneseq
    %v2788 = vshrl.u32 %v2787, 7
    %v2789 = vsub.s32 %v2786, %v2788
    %v2790 = vrot.slane %v2782, %v2789
    %v2792 = vunpack.c.l.s4 1983009808
    %v2793 = vunpack.c.0.s8 %v2792
    %v2794 = vlaneseq
    %v2795 = vshrl.u32 %v2794, 7
    %v2796 = vsub.s32 %v2793, %v2795
    %v2797 = vrot.slane %v2783, %v2796
    %v2798 = vcombine.low %v2790, %v2797
    %v2799 = vcombine.high %v2790, %v2797
    %v2800 = vcombine.low %v2691, %v2699
    %v2801 = vcombine.low %v2707, %v2715
    %v2803 = vunpack.c.l.s4 1983009808
    %v2804 = vunpack.c.0.s8 %v2803
    %v2805 = vlaneseq
    %v2806 = vshrl.u32 %v2805, 7
    %v2807 = vsub.s32 %v2804, %v2806
    %v2808 = vrot.slane %v2800, %v2807
    %v2810 = vunpack.c.l.s4 1983009808
    %v2811 = vunpack.c.0.s8 %v2810
    %v2812 = vlaneseq
    %v2813 = vshrl.u32 %v2812, 7
    %v2814 = vsub.s32 %v2811, %v2813
    %v2815 = vrot.slane %v2801, %v2814
    %v2816 = vcombine.low %v2808, %v2815
    %v2817 = vcombine.high %v2808, %v2815
    %v2822 = vsel %vm969, %v2763, 0
    %v2824 = vsel %vm969, %v2781, 0
    %v2826 = vsel %vm969, %v2799, 0
    %v2828 = vsel %vm969, %v2817, 0
    %v2831 = vsel %vm978, %v2738, 0
    %2833 = vmatprep.subr.mxu0 0.0
    %2834 = vmatpush1.msra.mxu0 %v2716
    %2835 = vmatprep.subr.mxu0 0.0
    %2836 = vmatpush1.msra.mxu0 %v2717
    %2837 = vmatprep.subr.mxu0 0.0
    %2838 = vmatpush1.msra.mxu0 %v2718
    %2839 = vmatprep.subr.mxu0 0.0
    %2840 = vmatpush1.msra.mxu0 %v2719
    %2841 = vmatprep.subr.mxu0 0.0
    %2842 = vmatpush1.msra.mxu0 %v2720
    %2843 = vmatprep.subr.mxu0 0.0
    %2844 = vmatpush1.msra.mxu0 %v2721
    %2845 = vmatprep.subr.mxu0 0.0
    %2846 = vmatpush1.msra.mxu0 %v2722
    %2847 = vmatprep.subr.mxu0 0.0
    %2848 = vmatpush1.msra.mxu0 %v2723
    %2849 = vmatprep.subr.mxu0 0.0
    %2850 = vmatpush1.msra.mxu0 %v2724
    %2851 = vmatprep.subr.mxu0 0.0
    %2852 = vmatpush1.msra.mxu0 %v2725
    %2853 = vmatprep.subr.mxu0 0.0
    %2854 = vmatpush1.msra.mxu0 %v2726
    %2855 = vmatprep.subr.mxu0 0.0
    %2856 = vmatpush1.msra.mxu0 %v2727
    %2857 = vmatprep.subr.mxu0 0.0
    %2858 = vmatpush1.msra.mxu0 %v2728
    %2859 = vmatprep.subr.mxu0 0.0
    %2860 = vmatpush1.msra.mxu0 %v2729
    %2861 = vmatprep.subr.mxu0 0.0
    %2862 = vmatpush1.msra.mxu0 %v2730
    %2863 = vmatprep.subr.mxu0 0.0
    %2864 = vmatpush1.msra.mxu0 %v2731
    %2865 = vmatprep.subr.mxu0 0.0
    %2866 = vmatpush1.msra.mxu0 %v2732
    %2867 = vmatprep.subr.mxu0 0.0
    %2868 = vmatpush1.msra.mxu0 %v2733
    %2869 = vmatprep.subr.mxu0 0.0
    %2870 = vmatpush1.msra.mxu0 %v2734
    %2871 = vmatprep.subr.mxu0 0.0
    %2872 = vmatpush1.msra.mxu0 %v2735
    %2873 = vmatprep.subr.mxu0 0.0
    %2874 = vmatpush1.msra.mxu0 %v2736
    %2875 = vmatprep.subr.mxu0 0.0
    %2876 = vmatpush1.msra.mxu0 %v2737
    %2877 = vmatprep.subr.mxu0 0.0
    %2878 = vmatpush1.msra.mxu0 %v2831
    %2879 = vmatprep.subr.mxu0 0.0
    %2880 = vmatpush1.msra.mxu0 0.0
    %2881 = vmatprep.subr.mxu0 0.0
    %2882 = vmatpush1.msra.mxu0 0.0
    %2883 = vmatprep.subr.mxu0 0.0
    %2884 = vmatpush1.msra.mxu0 0.0
    %2885 = vmatprep.subr.mxu0 0.0
    %2886 = vmatpush1.msra.mxu0 0.0
    %2887 = vmatprep.subr.mxu0 0.0
    %2888 = vmatpush1.msra.mxu0 0.0
    %2889 = vmatprep.subr.mxu0 0.0
    %2890 = vmatpush1.msra.mxu0 0.0
    %2891 = vmatprep.subr.mxu0 0.0
    %2892 = vmatpush1.msra.mxu0 0.0
    %2893 = vmatprep.subr.mxu0 0.0
    %2894 = vmatpush1.msra.mxu0 0.0
    %2895 = vmatprep.subr.mxu0 0.0
    %2896 = vmatpush1.msra.mxu0 0.0
    %2897 = vmatprep.mubr.f32.mxu0 %v2822
    %2898 = vmatmul.mubr.f32.gmra.mrb[0].mxu0 %v2762
    %v2899 = vpop.f32.mrb[0].mxu0
    %v2900 = vadd.f32 %v2744, %v2899
    %v2901 = vpop.f32.mrb[0].mxu0
    %2902 = vmatprep.mubr.f32.mxu0 %v2824
    %2903 = vmatmul.mubr.f32.gmra.mrb[0].mxu0 %v2780
    %v2904 = vpop.f32.mrb[0].mxu0
    %v2905 = vadd.f32 %v2744, %v2904
    %v2906 = vpop.f32.mrb[0].mxu0
    %2907 = vmatprep.mubr.f32.mxu0 %v2826
    %2908 = vmatmul.mubr.f32.gmra.mrb[0].mxu0 %v2798
    %v2909 = vpop.f32.mrb[0].mxu0
    %v2910 = vadd.f32 %v2744, %v2909
    %v2911 = vpop.f32.mrb[0].mxu0
    %2912 = vmatprep.mubr.f32.mxu0 %v2828
    %2913 = vmatmul.mubr.f32.gmra.mrb[0].mxu0 %v2816
    %v2914 = vpop.f32.mrb[0].mxu0
    %v2915 = vadd.f32 %v2744, %v2914
    %v2916 = vpop.f32.mrb[0].mxu0
    %2917 = vdwg.mxu0
    %v2918 = vmax.f32 %v2900, 0.0
    %v2919 = vmax.f32 %v2905, 0.0
    %v2920 = vmax.f32 %v2910, 0.0
    %v2921 = vmax.f32 %v2915, 0.0
    %v2926 = vcombine.high %v2918, %v2918
    %v2928 = vunpack.c.l.s4 1983009808
    %v2929 = vunpack.c.0.s8 %v2928
    %v2930 = vlaneseq
    %v2931 = vshrl.u32 %v2930, 7
    %v2932 = vsub.s32 %v2929, %v2931
    %v2933 = vrot.slane %v2918, %v2932
    %v2935 = vunpack.c.l.s4 1983009808
    %v2936 = vunpack.c.0.s8 %v2935
    %v2937 = vlaneseq
    %v2938 = vshrl.u32 %v2937, 7
    %v2939 = vsub.s32 %v2936, %v2938
    %v2940 = vrot.slane %v2926, %v2939
    %v2941 = vcombine.high %v2933, %v2933
    %v2942 = vcombine.high %v2940, %v2940
    %v2943 = vcombine.high %v2919, %v2919
    %v2945 = vunpack.c.l.s4 1983009808
    %v2946 = vunpack.c.0.s8 %v2945
    %v2947 = vlaneseq
    %v2948 = vshrl.u32 %v2947, 7
    %v2949 = vsub.s32 %v2946, %v2948
    %v2950 = vrot.slane %v2919, %v2949
    %v2952 = vunpack.c.l.s4 1983009808
    %v2953 = vunpack.c.0.s8 %v2952
    %v2954 = vlaneseq
    %v2955 = vshrl.u32 %v2954, 7
    %v2956 = vsub.s32 %v2953, %v2955
    %v2957 = vrot.slane %v2943, %v2956
    %v2958 = vcombine.high %v2950, %v2950
    %v2959 = vcombine.high %v2957, %v2957
    %v2960 = vcombine.high %v2920, %v2920
    %v2962 = vunpack.c.l.s4 1983009808
    %v2963 = vunpack.c.0.s8 %v2962
    %v2964 = vlaneseq
    %v2965 = vshrl.u32 %v2964, 7
    %v2966 = vsub.s32 %v2963, %v2965
    %v2967 = vrot.slane %v2920, %v2966
    %v2969 = vunpack.c.l.s4 1983009808
    %v2970 = vunpack.c.0.s8 %v2969
    %v2971 = vlaneseq
    %v2972 = vshrl.u32 %v2971, 7
    %v2973 = vsub.s32 %v2970, %v2972
    %v2974 = vrot.slane %v2960, %v2973
    %v2975 = vcombine.high %v2967, %v2967
    %v2976 = vcombine.high %v2974, %v2974
    %v2977 = vcombine.high %v2921, %v2921
    %v2979 = vunpack.c.l.s4 1983009808
    %v2980 = vunpack.c.0.s8 %v2979
    %v2981 = vlaneseq
    %v2982 = vshrl.u32 %v2981, 7
    %v2983 = vsub.s32 %v2980, %v2982
    %v2984 = vrot.slane %v2921, %v2983
    %v2986 = vunpack.c.l.s4 1983009808
    %v2987 = vunpack.c.0.s8 %v2986
    %v2988 = vlaneseq
    %v2989 = vshrl.u32 %v2988, 7
    %v2990 = vsub.s32 %v2987, %v2989
    %v2991 = vrot.slane %v2977, %v2990
    %v2992 = vcombine.high %v2984, %v2984
    %v2993 = vcombine.high %v2991, %v2991
    %3010 = vst.msk [vmem:[#allocation4] sm:$0x3] %vm430, %v2933
    %3011 = vst.msk [vmem:[#allocation4 + $0x2] sm:$0x3] %vm430, %v2941
    %3012 = vst.msk [vmem:[#allocation4 + $0x4] sm:$0x3] %vm430, %v2940
    %3013 = vst.msk [vmem:[#allocation4 + $0x6] sm:$0x3] %vm430, %v2942
    %3014 = vst.msk [vmem:[#allocation4 + $0x8] sm:$0x3] %vm430, %v2950
    %3015 = vst.msk [vmem:[#allocation4 + $0xa] sm:$0x3] %vm430, %v2958
    %3016 = vst.msk [vmem:[#allocation4 + $0xc] sm:$0x3] %vm430, %v2957
    %3017 = vst.msk [vmem:[#allocation4 + $0xe] sm:$0x3] %vm430, %v2959
    %3018 = vst.msk [vmem:[#allocation4 + $0x10] sm:$0x3] %vm430, %v2967
    %3019 = vst.msk [vmem:[#allocation4 + $0x12] sm:$0x3] %vm430, %v2975
    %3020 = vst.msk [vmem:[#allocation4 + $0x14] sm:$0x3] %vm430, %v2974
    %3021 = vst.msk [vmem:[#allocation4 + $0x16] sm:$0x3] %vm430, %v2976
    %3022 = vst.msk [vmem:[#allocation4 + $0x18] sm:$0x3] %vm430, %v2984
    %3023 = vst.msk [vmem:[#allocation4 + $0x1a] sm:$0x3] %vm430, %v2992
    %3024 = vst.msk [vmem:[#allocation4 + $0x1c] sm:$0x3] %vm430, %v2991
    %3025 = vst.msk [vmem:[#allocation4 + $0x1e] sm:$0x3] %vm430, %v2993
    // Predicated region
    $region22: #{tpu_custom_call.1} parent=1 // pred_check
      _
    $region23: #{tpu_custom_call.1} parent=1 // pred_check_branch
      %3027 = sbr.rel (0) target = $region25
    $region24: #{tpu_custom_call.1} parent=1 // pred_region
      %s3029 = ssub.s32 512, 512
      %3030 = vsyncadd [#allocation5], %s3029
      %s3031 = sshll.u32 [#allocation4], 4
      %s3032 = int_to_ptr.vmem [resolvable:$true] %s3031
      %3037 = dma.vmem_to_hbm [thread:$0]  %s3032, 512, %s5, [#allocation5], 32, 32, 2
    $region25: #{tpu_custom_call.1} parent=1 // pred_fallthru
      _
    // Predicated region
    $region26: #{tpu_custom_call.1} parent=1 // pred_check
      _
    $region27: #{tpu_custom_call.1} parent=1 // pred_check_branch
      %3039 = sbr.rel (0) target = $region29
    $region28: #{tpu_custom_call.1} parent=1 // pred_region
      %3040 = dma.done [#allocation5], 512
    $region29: #{tpu_custom_call.1} parent=1 // pred_fallthru
      _
    %3041 = vsyncpa [#allocation5], 1

</llo_original>
